<compile_context>
chip_gen: v7x
topology: tpu7x:2x2x1
jax: 0.10.0
libtpu: 0.0.40
codegen_flags: <defaults>
</compile_context>

<pallas_src>
import jax
import jax.numpy as jnp
from jax import lax
from jax.experimental import pallas as pl
from jax.experimental.pallas import tpu as pltpu


def _round_up(x, m):
    return (x + m - 1) // m * m


# ---------------------------------------------------------------------------
# Pass 1: LSTM recurrence + fused linear1/relu  ->  hid (B_pad, H2p)
# ---------------------------------------------------------------------------
def lstm_recurrence_kernel(blockmax_smem,   # (num_b,)      int32, scalar prefetch
                           len_ref,         # (Bc, 1)       int32 per-row lengths
                           x_ref,           # (Tc, Bc, E)   compute dtype
                           wih_ref,         # (E, 4*Hp)     compute dtype
                           whh_ref,         # (Hp, 4*Hp)    compute dtype
                           bias_ref,        # (1, 4*Hp)     f32 (= b_ih + b_hh)
                           w1_ref,          # (Hp, H2p)     compute dtype
                           b1_ref,          # (1, H2p)      f32
                           hid_out_ref,     # (Bc, H2p)     compute dtype
                           h_sc,            # (Bc, Hp)      compute dtype scratch
                           c_sc,            # (Bc, Hp)      f32 scratch
                           xproj_sc):       # (Tc*Bc, 4*Hp) f32 scratch
    b_idx = pl.program_id(0)
    t_idx = pl.program_id(1)
    num_t = pl.num_programs(1)
    Tc, Bc, _E = x_ref.shape
    Hp = whh_ref.shape[0]

    @pl.when(t_idx == 0)
    def _init():
        h_sc[...] = jnp.zeros_like(h_sc)
        c_sc[...] = jnp.zeros_like(c_sc)

    t0 = t_idx * Tc

    # Every row of this B block is already exhausted -> skip the whole block
    # (its x DMA is also elided by the clamped index_map in the wrapper).
    @pl.when(t0 < blockmax_smem[b_idx])
    def _compute():
        # Leading-dim merge (Tc, Bc, E) -> (Tc*Bc, E) is layout-preserving
        # (Bc % 8 == 0): a reinterpretation, not a copy.
        x2d = x_ref[...].reshape(Tc * Bc, x_ref.shape[2])
        # Hoisted input projection: ONE batched MXU matmul covering all Tc
        # steps of this block, staged in VMEM scratch so the serial loop's
        # live set stays small (no vreg spills at large Bc).
        xproj_sc[...] = (jnp.dot(x2d, wih_ref[...],
                                 preferred_element_type=jnp.float32)
                         + bias_ref[...])

        whh = whh_ref[...]                                # hoisted weight load
        # Hoisted lane-broadcast of lengths (JAX does not CSE broadcasts).
        len_bcast = jnp.broadcast_to(len_ref[...], (Bc, Hp))

        def step(tt, carry):
            h, c = carry                                  # h: cdt, c: f32
            row0 = pl.multiple_of(tt * Bc, Bc)
            gates = (xproj_sc[pl.ds(row0, Bc), :]
                     + jnp.dot(h, whh, preferred_element_type=jnp.float32))
            i_g = jax.nn.sigmoid(gates[:, 0 * Hp:1 * Hp])
            f_g = jax.nn.sigmoid(gates[:, 1 * Hp:2 * Hp])
            g_g = jnp.tanh(gates[:, 2 * Hp:3 * Hp])
            o_g = jax.nn.sigmoid(gates[:, 3 * Hp:4 * Hp])
            c_new = f_g * c + i_g * g_g
            h_new = o_g * jnp.tanh(c_new)
            # pack_padded_sequence semantics: freeze rows past their length.
            valid = (t0 + tt) < len_bcast                 # (Bc, Hp) bool
            h = jnp.where(valid, h_new.astype(h.dtype), h)
            c = jnp.where(valid, c_new, c)
            return h, c

        h, c = lax.fori_loop(0, Tc, step, (h_sc[...], c_sc[...]), unroll=True)
        h_sc[...] = h
        c_sc[...] = c

    @pl.when(t_idx == num_t - 1)
    def _write():
        # Fused first MLP layer: hid = relu(h_last @ w1 + b1).
        hid = jnp.maximum(
            jnp.dot(h_sc[...], w1_ref[...],
                    preferred_element_type=jnp.float32) + b1_ref[...], 0.0)
        hid_out_ref[...] = hid.astype(hid_out_ref.dtype)


# ---------------------------------------------------------------------------
# Pass 2: scores = hid @ w2 + b2, tiled over items (b innermost -> w2 streams once)
# ---------------------------------------------------------------------------
def mlp_head_kernel(hid_ref,   # (Bc, H2p)  compute dtype
                    w2_ref,    # (H2p, Ic)  compute dtype
                    b2_ref,    # (1, Ic)    f32
                    out_ref):  # (Bc, Ic)   f32
    out_ref[...] = (jnp.dot(hid_ref[...], w2_ref[...],
                            preferred_element_type=jnp.float32)
                    + b2_ref[...])


# ---------------------------------------------------------------------------
# Wrapper
# ---------------------------------------------------------------------------
def vanilla_lstm_forward(item_emb_tbe, sample_len, params, *,
                         compute_dtype=jnp.bfloat16,
                         block_b=256, block_t=16, block_i=1024):
    """item_emb_tbe: (T, B, E) f32 embedded (dropout == identity) items,
       time-major.  sample_len: (B,) int valid lengths.  params: dict from
       init_params (weights stored as (in_features, out_features)).
       Set compute_dtype=jnp.float32 for a full-precision path."""
    T, B, E = item_emb_tbe.shape
    H = params["w_hh"].shape[0]
    H2 = params["w1"].shape[1]
    I = params["w2"].shape[1]
    f32 = jnp.float32
    cdt = compute_dtype

    # ---- padded / tiled sizes --------------------------------------------
    Hp = _round_up(H, 128)                     # lane-aligned hidden & gate slabs
    H2p = _round_up(H2, 128)
    # bf16 packs two rows per sublane -> 16-row batch-tile alignment.
    b_align = 16 if jnp.dtype(cdt).itemsize < 4 else 8
    Bc = min(_round_up(B, b_align), block_b)   # batch tile
    B_pad = _round_up(B, Bc)
    Tc = min(T, block_t)                       # timesteps per recurrence block
    T_pad = _round_up(T, Tc)
    Ic = min(_round_up(I, 128), block_i)       # lane-dense item tile
    I_pad = _round_up(I, Ic)
    num_b, num_t, num_i = B_pad // Bc, T_pad // Tc, I_pad // Ic

    # ---- pad + cast operands (zero padding keeps padded hidden units,
    #      padded batch rows and padded item columns exactly inert) ---------
    # x keeps its natural (T, B, E) layout: only zero-pad + cast, no
    # materialized re-blocking / transpose in HBM.
    x = jnp.zeros((T_pad, B_pad, E), cdt).at[:T, :B, :].set(
        item_emb_tbe.astype(cdt))

    lens = jnp.zeros((B_pad,), jnp.int32).at[:B].set(
        jnp.asarray(sample_len, jnp.int32))
    lens2d = lens.reshape(B_pad, 1)
    block_max = jnp.max(lens.reshape(num_b, Bc), axis=1)    # (num_b,) -> SMEM

    # LSTM weights: each gate slab padded H -> Hp so gate slices are lane
    # aligned; gate order [i, f, g, o] (PyTorch), bias = b_ih + b_hh.
    w_ih = jnp.zeros((E, 4 * Hp), cdt)
    w_hh = jnp.zeros((Hp, 4 * Hp), cdt)
    bias = jnp.zeros((1, 4 * Hp), f32)
    for g in range(4):
        w_ih = w_ih.at[:, g * Hp:g * Hp + H].set(
            params["w_ih"][:, g * H:(g + 1) * H].astype(cdt))
        w_hh = w_hh.at[:H, g * Hp:g * Hp + H].set(
            params["w_hh"][:, g * H:(g + 1) * H].astype(cdt))
        bias = bias.at[:, g * Hp:g * Hp + H].set(
            params["b"][:, g * H:(g + 1) * H])

    w1 = jnp.zeros((Hp, H2p), cdt).at[:H, :H2].set(params["w1"].astype(cdt))
    b1 = jnp.zeros((1, H2p), f32).at[:, :H2].set(params["b1"])
    w2 = jnp.zeros((H2p, I_pad), cdt).at[:H2, :I].set(params["w2"].astype(cdt))
    b2 = jnp.zeros((1, I_pad), f32).at[:, :I].set(params["b2"])

    # ---- pass 1: recurrence + fused linear1/relu -> hid ---------------------
    def x_index_map(b, t, blockmax):
        # Clamp t past this block's max length: skipped T blocks return the
        # same block index, so the pipeline does not issue a fresh DMA.
        last = jnp.maximum(pl.cdiv(blockmax[b], Tc) - 1, 0)
        return (jnp.minimum(t, last), b, 0)

    grid_spec = pltpu.PrefetchScalarGridSpec(
        num_scalar_prefetch=1,
        grid=(num_b, num_t),
        in_specs=[
            pl.BlockSpec((Bc, 1), lambda b, t, bm: (b, 0)),        # lengths
            pl.BlockSpec((Tc, Bc, E), x_index_map),                # x tile
            pl.BlockSpec((E, 4 * Hp), lambda b, t, bm: (0, 0)),    # w_ih
            pl.BlockSpec((Hp, 4 * Hp), lambda b, t, bm: (0, 0)),   # w_hh
            pl.BlockSpec((1, 4 * Hp), lambda b, t, bm: (0, 0)),    # bias
            pl.BlockSpec((Hp, H2p), lambda b, t, bm: (0, 0)),      # w1
            pl.BlockSpec((1, H2p), lambda b, t, bm: (0, 0)),       # b1
        ],
        out_specs=pl.BlockSpec((Bc, H2p), lambda b, t, bm: (b, 0)),
        scratch_shapes=[pltpu.VMEM((Bc, Hp), cdt),                 # h (bf16 carry)
                        pltpu.VMEM((Bc, Hp), f32),                 # c
                        pltpu.VMEM((Tc * Bc, 4 * Hp), f32)],       # xproj
    )
    hid = pl.pallas_call(
        lstm_recurrence_kernel,
        out_shape=jax.ShapeDtypeStruct((B_pad, H2p), cdt),
        grid_spec=grid_spec,
        compiler_params=pltpu.CompilerParams(
            # B blocks shard across TensorCores; T is the serial recurrence.
            dimension_semantics=("parallel", "arbitrary"),
            # Budget sized for v7x's 64 MiB physical VMEM (plenty on v5e/v6e).
            vmem_limit_bytes=48 * 1024 * 1024,
        ),
    )(block_max, lens2d, x, w_ih, w_hh, bias, w1, b1)

    # ---- pass 2: scores = hid @ w2 + b2, b innermost so w2 streams once -----
    scores = pl.pallas_call(
        mlp_head_kernel,
        out_shape=jax.ShapeDtypeStruct((B_pad, I_pad), f32),
        grid=(num_i, num_b),
        in_specs=[
            pl.BlockSpec((Bc, H2p), lambda i, b: (b, 0)),
            pl.BlockSpec((H2p, Ic), lambda i, b: (0, i)),   # constant over b
            pl.BlockSpec((1, Ic), lambda i, b: (0, i)),
        ],
        out_specs=pl.BlockSpec((Bc, Ic), lambda i, b: (b, i)),
        compiler_params=pltpu.CompilerParams(
            dimension_semantics=("parallel", "parallel"),
            vmem_limit_bytes=32 * 1024 * 1024,
        ),
    )(hid, w2, b2)

    return scores[:B, :I]


# ---------------------------------------------------------------------------
# Parameters and pure-JAX f32 reference
# ---------------------------------------------------------------------------
def init_params(key, embed_size, hidden_size, item_num, user_num):
    ks = jax.random.split(key, 10)
    E, H, I = embed_size, hidden_size, item_num
    # Embedding tables (user_embedding is unused in forward, kept for parity).
    item_table = jax.random.normal(ks[0], (I + 1, E), jnp.float32) * 0.1
    item_table = item_table.at[0].set(0.0)                      # padding_idx=0
    user_table = jax.random.normal(ks[1], (user_num, E), jnp.float32) * 0.1
    # LSTM weights, stored transposed (in, 4H); gate order [i, f, g, o].
    w_ih = jax.random.normal(ks[2], (E, 4 * H), jnp.float32) * 0.1
    w_hh = jax.random.normal(ks[3], (H, 4 * H), jnp.float32) * 0.1
    b_ih = jax.random.normal(ks[4], (4 * H,), jnp.float32) * 0.1
    b_hh = jax.random.normal(ks[5], (4 * H,), jnp.float32) * 0.1
    # MLP head, transposed to (in, out).
    w1 = jax.random.normal(ks[6], (H, H // 2), jnp.float32) * 0.1
    b1 = jax.random.normal(ks[7], (H // 2,), jnp.float32) * 0.1
    w2 = jax.random.normal(ks[8], (H // 2, I), jnp.float32) * 0.1
    b2 = jax.random.normal(ks[9], (I,), jnp.float32) * 0.1
    return {
        "item_table": item_table, "user_table": user_table,
        "w_ih": w_ih, "w_hh": w_hh,
        "b": (b_ih + b_hh).reshape(1, 4 * H),
        "w1": w1, "b1": b1.reshape(1, H // 2),
        "w2": w2, "b2": b2.reshape(1, I),
    }


def reference_forward(item_emb_bte, sample_len, params):
    """Pure-JAX f32 reference matching the PyTorch module (dropout==id)."""
    B, T, E = item_emb_bte.shape
    H = params["w_hh"].shape[0]
    h = jnp.zeros((B, H), jnp.float32)
    c = jnp.zeros((B, H), jnp.float32)
    for t in range(T):
        x_t = item_emb_bte[:, t, :]
        g = x_t @ params["w_ih"] + h @ params["w_hh"] + params["b"]
        i_g = jax.nn.sigmoid(g[:, :H])
        f_g = jax.nn.sigmoid(g[:, H:2 * H])
        g_g = jnp.tanh(g[:, 2 * H:3 * H])
        o_g = jax.nn.sigmoid(g[:, 3 * H:])
        c_new = f_g * c + i_g * g_g
        h_new = o_g * jnp.tanh(c_new)
        valid = (t < sample_len)[:, None]
        h = jnp.where(valid, h_new, h)
        c = jnp.where(valid, c_new, c)
    hid = jnp.maximum(h @ params["w1"] + params["b1"], 0.0)
    return hid @ params["w2"] + params["b2"]


if __name__ == "__main__":
    # Small config consistent with the module.
    B, T = 2, 8
    embed_size, hidden_size = 32, 32
    item_num, user_num = 64, 8

    root = jax.random.PRNGKey(0)
    k_params, k_item, k_user = jax.random.split(root, 3)
    params = init_params(k_params, embed_size, hidden_size, item_num, user_num)

    # item ids in [1, item_num] (0 = padding); lengths descending
    # (pack_padded_sequence default enforce_sorted=True).
    sample_len = jnp.array([8, 5], dtype=jnp.int32)
    item = jax.random.randint(k_item, (B, T), 1, item_num + 1, jnp.int32)
    pad_mask = jnp.arange(T)[None, :] < sample_len[:, None]
    item = jnp.where(pad_mask, item, 0)
    user = jax.random.randint(k_user, (B,), 0, user_num, jnp.int32)  # unused in forward

    # Glue in plain JAX: embedding gather (+ dropout == identity), gathered
    # directly into the time-major layout (no large activation transpose).
    item_emb_tbe = params["item_table"][item.T]          # (T, B, E)

    scores = vanilla_lstm_forward(item_emb_tbe, sample_len, params)
    jax.block_until_ready(scores)
    assert scores.shape == (B, item_num) and scores.dtype == jnp.float32

    # Check against the pure-JAX f32 reference (kernel matmuls use bf16
    # operands with f32 accumulation, so the tolerance is loose).
    item_emb_bte = jnp.transpose(item_emb_tbe, (1, 0, 2))
    ref = reference_forward(item_emb_bte, sample_len, params)
    max_err = float(jnp.max(jnp.abs(scores - ref)))
    assert max_err < 5e-2, f"max |scores - ref| = {max_err}"
    print("KERNEL_OK")
</pallas_src>

<mosaic_0001>
module attributes {stable_mosaic.version = 11 : i64} {
  func.func @lstm_recurrence_kernel(%arg0: i32, %arg1: i32, %arg2: memref<1xi32, #tpu.memory_space<smem>>, %arg3: memref<16x1xi32, #tpu.memory_space<vmem>>, %arg4: memref<8x16x32xbf16, #tpu.memory_space<vmem>>, %arg5: memref<32x512xbf16, #tpu.memory_space<vmem>>, %arg6: memref<128x512xbf16, #tpu.memory_space<vmem>>, %arg7: memref<1x512xf32, #tpu.memory_space<vmem>>, %arg8: memref<128x128xbf16, #tpu.memory_space<vmem>>, %arg9: memref<1x128xf32, #tpu.memory_space<vmem>>, %arg10: memref<16x128xbf16, #tpu.memory_space<vmem>>, %arg11: memref<16x128xbf16, #tpu.memory_space<vmem>>, %arg12: memref<16x128xf32, #tpu.memory_space<vmem>>, %arg13: memref<128x512xf32, #tpu.memory_space<vmem>>) attributes {dimension_semantics = [#tpu.dimension_semantics<parallel>, #tpu.dimension_semantics<arbitrary>], iteration_bounds = array<i64: 1, 1>, scalar_prefetch = 1 : i64, scratch_operands = 3 : i64, tpu.core_type = #tpu.core_type<tc>, window_params = [{transform_indices = @transform_0, window_bounds = array<i64: 16, 1>}, {transform_indices = @transform_1, window_bounds = array<i64: 8, 16, 32>}, {pipeline_mode = #tpu.pipeline_mode<synchronous>, transform_indices = @transform_2, window_bounds = array<i64: 32, 512>}, {pipeline_mode = #tpu.pipeline_mode<synchronous>, transform_indices = @transform_3, window_bounds = array<i64: 128, 512>}, {pipeline_mode = #tpu.pipeline_mode<synchronous>, transform_indices = @transform_4, window_bounds = array<i64: 1, 512>}, {pipeline_mode = #tpu.pipeline_mode<synchronous>, transform_indices = @transform_5, window_bounds = array<i64: 128, 128>}, {pipeline_mode = #tpu.pipeline_mode<synchronous>, transform_indices = @transform_6, window_bounds = array<i64: 1, 128>}, {transform_indices = @transform_7, window_bounds = array<i64: 16, 128>}]} {
    %c0_i32 = arith.constant 0 : i32
    %0 = arith.cmpi eq, %arg1, %c0_i32 : i32
    %1 = arith.extui %0 : i1 to i32
    %c0_i32_0 = arith.constant 0 : i32
    %2 = arith.cmpi ne, %1, %c0_i32_0 : i32
    scf.if %2 {
      %cst = arith.constant 0.000000e+00 : bf16
      %12 = vector.broadcast %cst : bf16 to vector<16x128xbf16>
      %c0 = arith.constant 0 : index
      %c0_4 = arith.constant 0 : index
      %13 = vector.load %arg11[%c0, %c0_4] : memref<16x128xbf16, #tpu.memory_space<vmem>>, vector<16x128xbf16>
      tpu.vector_store %arg11[%c0, %c0_4], %12 {strides = array<i32>} : memref<16x128xbf16, #tpu.memory_space<vmem>>, vector<16x128xbf16>,
      %cst_5 = arith.constant 0.000000e+00 : f32
      %14 = vector.broadcast %cst_5 : f32 to vector<16x128xf32>
      %c0_6 = arith.constant 0 : index
      %c0_7 = arith.constant 0 : index
      %15 = vector.load %arg12[%c0_6, %c0_7] : memref<16x128xf32, #tpu.memory_space<vmem>>, vector<16x128xf32>
      tpu.vector_store %arg12[%c0_6, %c0_7], %14 {strides = array<i32>} : memref<16x128xf32, #tpu.memory_space<vmem>>, vector<16x128xf32>,
    } else {
    }
    %c8_i32 = arith.constant 8 : i32
    %3 = arith.muli %arg1, %c8_i32 : i32
    %4 = arith.index_cast %arg0 : i32 to index
    %5 = memref.load %arg2[%4] : memref<1xi32, #tpu.memory_space<smem>>
    %6 = arith.cmpi slt, %3, %5 : i32
    %7 = arith.extui %6 : i1 to i32
    %c0_i32_1 = arith.constant 0 : i32
    %8 = arith.cmpi ne, %7, %c0_i32_1 : i32
    scf.if %8 {
      %c0 = arith.constant 0 : index
      %c0_4 = arith.constant 0 : index
      %c0_5 = arith.constant 0 : index
      %12 = vector.load %arg4[%c0, %c0_4, %c0_5] : memref<8x16x32xbf16, #tpu.memory_space<vmem>>, vector<8x16x32xbf16>
      %13 = vector.shape_cast %12 : vector<8x16x32xbf16> to vector<128x32xbf16>
      %c0_6 = arith.constant 0 : index
      %c0_7 = arith.constant 0 : index
      %14 = vector.load %arg5[%c0_6, %c0_7] : memref<32x512xbf16, #tpu.memory_space<vmem>>, vector<32x512xbf16>
      %cst = arith.constant dense<0.000000e+00> : vector<128x512xf32>
      %15 = tpu.matmul %13, %14, %cst {dimension_numbers = #tpu.dot_dimension_numbers<[1], [0], [0], [1], [0, 0, 1, 1], [], []>} : vector<128x32xbf16>, vector<32x512xbf16>, vector<128x512xf32> -> vector<128x512xf32>
      %c0_8 = arith.constant 0 : index
      %c0_9 = arith.constant 0 : index
      %16 = vector.load %arg7[%c0_8, %c0_9] : memref<1x512xf32, #tpu.memory_space<vmem>>, vector<1x512xf32>
      %17 = vector.broadcast %16 : vector<1x512xf32> to vector<128x512xf32>
      %18 = arith.addf %15, %17 : vector<128x512xf32>
      %c0_10 = arith.constant 0 : index
      %c0_11 = arith.constant 0 : index
      %19 = vector.load %arg13[%c0_10, %c0_11] : memref<128x512xf32, #tpu.memory_space<vmem>>, vector<128x512xf32>
      tpu.vector_store %arg13[%c0_10, %c0_11], %18 {strides = array<i32>} : memref<128x512xf32, #tpu.memory_space<vmem>>, vector<128x512xf32>,
      %c0_12 = arith.constant 0 : index
      %c0_13 = arith.constant 0 : index
      %20 = vector.load %arg6[%c0_12, %c0_13] : memref<128x512xbf16, #tpu.memory_space<vmem>>, vector<128x512xbf16>
      %c0_14 = arith.constant 0 : index
      %c0_15 = arith.constant 0 : index
      %21 = vector.load %arg3[%c0_14, %c0_15] : memref<16x1xi32, #tpu.memory_space<vmem>>, vector<16x1xi32>
      %22 = vector.shape_cast %21 : vector<16x1xi32> to vector<16x1xi32>
      %23 = vector.broadcast %22 : vector<16x1xi32> to vector<16x128xi32>
      %c0_16 = arith.constant 0 : index
      %c0_17 = arith.constant 0 : index
      %24 = vector.load %arg11[%c0_16, %c0_17] : memref<16x128xbf16, #tpu.memory_space<vmem>>, vector<16x128xbf16>
      %c0_18 = arith.constant 0 : index
      %c0_19 = arith.constant 0 : index
      %25 = vector.load %arg12[%c0_18, %c0_19] : memref<16x128xf32, #tpu.memory_space<vmem>>, vector<16x128xf32>
      %c0_i32_20 = arith.constant 0 : i32
      %c16_i32 = arith.constant 16 : i32
      %26 = arith.muli %c0_i32_20, %c16_i32 : i32
      %27 = tpu.assume_multiple %26, 16 : i32
      %28 = arith.index_cast %27 : i32 to index
      %c0_21 = arith.constant 0 : index
      %29 = vector.load %arg13[%28, %c0_21] : memref<128x512xf32, #tpu.memory_space<vmem>>, vector<16x512xf32>
      %cst_22 = arith.constant dense<0.000000e+00> : vector<16x512xf32>
      %30 = tpu.matmul %24, %20, %cst_22 {dimension_numbers = #tpu.dot_dimension_numbers<[1], [0], [0], [1], [0, 0, 1, 1], [], []>} : vector<16x128xbf16>, vector<128x512xbf16>, vector<16x512xf32> -> vector<16x512xf32>
      %31 = arith.addf %29, %30 : vector<16x512xf32>
      %32 = vector.extract_strided_slice %31 {offsets = [0, 0], sizes = [16, 128], strides = [1, 1]} : vector<16x512xf32> to vector<16x128xf32>
      %33 = arith.negf %32 : vector<16x128xf32>
      %34 = math.exp %33 : vector<16x128xf32>
      %cst_23 = arith.constant 1.000000e+00 : f32
      %35 = vector.broadcast %cst_23 : f32 to vector<16x128xf32>
      %36 = arith.addf %35, %34 : vector<16x128xf32>
      %37 = arith.divf %35, %36 : vector<16x128xf32>
      %38 = vector.extract_strided_slice %31 {offsets = [0, 128], sizes = [16, 128], strides = [1, 1]} : vector<16x512xf32> to vector<16x128xf32>
      %39 = arith.negf %38 : vector<16x128xf32>
      %40 = math.exp %39 : vector<16x128xf32>
      %cst_24 = arith.constant 1.000000e+00 : f32
      %41 = vector.broadcast %cst_24 : f32 to vector<16x128xf32>
      %42 = arith.addf %41, %40 : vector<16x128xf32>
      %43 = arith.divf %41, %42 : vector<16x128xf32>
      %44 = vector.extract_strided_slice %31 {offsets = [0, 256], sizes = [16, 128], strides = [1, 1]} : vector<16x512xf32> to vector<16x128xf32>
      %45 = math.tanh %44 : vector<16x128xf32>
      %46 = vector.extract_strided_slice %31 {offsets = [0, 384], sizes = [16, 128], strides = [1, 1]} : vector<16x512xf32> to vector<16x128xf32>
      %47 = arith.negf %46 : vector<16x128xf32>
      %48 = math.exp %47 : vector<16x128xf32>
      %cst_25 = arith.constant 1.000000e+00 : f32
      %49 = vector.broadcast %cst_25 : f32 to vector<16x128xf32>
      %50 = arith.addf %49, %48 : vector<16x128xf32>
      %51 = arith.divf %49, %50 : vector<16x128xf32>
      %52 = arith.mulf %43, %25 : vector<16x128xf32>
      %53 = arith.mulf %37, %45 : vector<16x128xf32>
      %54 = arith.addf %52, %53 : vector<16x128xf32>
      %55 = math.tanh %54 : vector<16x128xf32>
      %56 = arith.mulf %51, %55 : vector<16x128xf32>
      %57 = arith.addi %3, %c0_i32_20 : i32
      %58 = vector.broadcast %57 : i32 to vector<16x128xi32>
      %59 = arith.cmpi slt, %58, %23 : vector<16x128xi32>
      %60 = arith.truncf %56 : vector<16x128xf32> to vector<16x128xbf16>
      %61 = arith.select %59, %60, %24 : vector<16x128xi1>, vector<16x128xbf16>
      %62 = arith.select %59, %54, %25 : vector<16x128xi1>, vector<16x128xf32>
      %c1_i32 = arith.constant 1 : i32
      %c16_i32_26 = arith.constant 16 : i32
      %63 = arith.muli %c1_i32, %c16_i32_26 : i32
      %64 = tpu.assume_multiple %63, 16 : i32
      %65 = arith.index_cast %64 : i32 to index
      %c0_27 = arith.constant 0 : index
      %66 = vector.load %arg13[%65, %c0_27] : memref<128x512xf32, #tpu.memory_space<vmem>>, vector<16x512xf32>
      %cst_28 = arith.constant dense<0.000000e+00> : vector<16x512xf32>
      %67 = tpu.matmul %61, %20, %cst_28 {dimension_numbers = #tpu.dot_dimension_numbers<[1], [0], [0], [1], [0, 0, 1, 1], [], []>} : vector<16x128xbf16>, vector<128x512xbf16>, vector<16x512xf32> -> vector<16x512xf32>
      %68 = arith.addf %66, %67 : vector<16x512xf32>
      %69 = vector.extract_strided_slice %68 {offsets = [0, 0], sizes = [16, 128], strides = [1, 1]} : vector<16x512xf32> to vector<16x128xf32>
      %70 = arith.negf %69 : vector<16x128xf32>
      %71 = math.exp %70 : vector<16x128xf32>
      %cst_29 = arith.constant 1.000000e+00 : f32
      %72 = vector.broadcast %cst_29 : f32 to vector<16x128xf32>
      %73 = arith.addf %72, %71 : vector<16x128xf32>
      %74 = arith.divf %72, %73 : vector<16x128xf32>
      %75 = vector.extract_strided_slice %68 {offsets = [0, 128], sizes = [16, 128], strides = [1, 1]} : vector<16x512xf32> to vector<16x128xf32>
      %76 = arith.negf %75 : vector<16x128xf32>
      %77 = math.exp %76 : vector<16x128xf32>
      %cst_30 = arith.constant 1.000000e+00 : f32
      %78 = vector.broadcast %cst_30 : f32 to vector<16x128xf32>
      %79 = arith.addf %78, %77 : vector<16x128xf32>
      %80 = arith.divf %78, %79 : vector<16x128xf32>
      %81 = vector.extract_strided_slice %68 {offsets = [0, 256], sizes = [16, 128], strides = [1, 1]} : vector<16x512xf32> to vector<16x128xf32>
      %82 = math.tanh %81 : vector<16x128xf32>
      %83 = vector.extract_strided_slice %68 {offsets = [0, 384], sizes = [16, 128], strides = [1, 1]} : vector<16x512xf32> to vector<16x128xf32>
      %84 = arith.negf %83 : vector<16x128xf32>
      %85 = math.exp %84 : vector<16x128xf32>
      %cst_31 = arith.constant 1.000000e+00 : f32
      %86 = vector.broadcast %cst_31 : f32 to vector<16x128xf32>
      %87 = arith.addf %86, %85 : vector<16x128xf32>
      %88 = arith.divf %86, %87 : vector<16x128xf32>
      %89 = arith.mulf %80, %62 : vector<16x128xf32>
      %90 = arith.mulf %74, %82 : vector<16x128xf32>
      %91 = arith.addf %89, %90 : vector<16x128xf32>
      %92 = math.tanh %91 : vector<16x128xf32>
      %93 = arith.mulf %88, %92 : vector<16x128xf32>
      %94 = arith.addi %3, %c1_i32 : i32
      %95 = vector.broadcast %94 : i32 to vector<16x128xi32>
      %96 = arith.cmpi slt, %95, %23 : vector<16x128xi32>
      %97 = arith.truncf %93 : vector<16x128xf32> to vector<16x128xbf16>
      %98 = arith.select %96, %97, %61 : vector<16x128xi1>, vector<16x128xbf16>
      %99 = arith.select %96, %91, %62 : vector<16x128xi1>, vector<16x128xf32>
      %c2_i32 = arith.constant 2 : i32
      %c16_i32_32 = arith.constant 16 : i32
      %100 = arith.muli %c2_i32, %c16_i32_32 : i32
      %101 = tpu.assume_multiple %100, 16 : i32
      %102 = arith.index_cast %101 : i32 to index
      %c0_33 = arith.constant 0 : index
      %103 = vector.load %arg13[%102, %c0_33] : memref<128x512xf32, #tpu.memory_space<vmem>>, vector<16x512xf32>
      %cst_34 = arith.constant dense<0.000000e+00> : vector<16x512xf32>
      %104 = tpu.matmul %98, %20, %cst_34 {dimension_numbers = #tpu.dot_dimension_numbers<[1], [0], [0], [1], [0, 0, 1, 1], [], []>} : vector<16x128xbf16>, vector<128x512xbf16>, vector<16x512xf32> -> vector<16x512xf32>
      %105 = arith.addf %103, %104 : vector<16x512xf32>
      %106 = vector.extract_strided_slice %105 {offsets = [0, 0], sizes = [16, 128], strides = [1, 1]} : vector<16x512xf32> to vector<16x128xf32>
      %107 = arith.negf %106 : vector<16x128xf32>
      %108 = math.exp %107 : vector<16x128xf32>
      %cst_35 = arith.constant 1.000000e+00 : f32
      %109 = vector.broadcast %cst_35 : f32 to vector<16x128xf32>
      %110 = arith.addf %109, %108 : vector<16x128xf32>
      %111 = arith.divf %109, %110 : vector<16x128xf32>
      %112 = vector.extract_strided_slice %105 {offsets = [0, 128], sizes = [16, 128], strides = [1, 1]} : vector<16x512xf32> to vector<16x128xf32>
      %113 = arith.negf %112 : vector<16x128xf32>
      %114 = math.exp %113 : vector<16x128xf32>
      %cst_36 = arith.constant 1.000000e+00 : f32
      %115 = vector.broadcast %cst_36 : f32 to vector<16x128xf32>
      %116 = arith.addf %115, %114 : vector<16x128xf32>
      %117 = arith.divf %115, %116 : vector<16x128xf32>
      %118 = vector.extract_strided_slice %105 {offsets = [0, 256], sizes = [16, 128], strides = [1, 1]} : vector<16x512xf32> to vector<16x128xf32>
      %119 = math.tanh %118 : vector<16x128xf32>
      %120 = vector.extract_strided_slice %105 {offsets = [0, 384], sizes = [16, 128], strides = [1, 1]} : vector<16x512xf32> to vector<16x128xf32>
      %121 = arith.negf %120 : vector<16x128xf32>
      %122 = math.exp %121 : vector<16x128xf32>
      %cst_37 = arith.constant 1.000000e+00 : f32
      %123 = vector.broadcast %cst_37 : f32 to vector<16x128xf32>
      %124 = arith.addf %123, %122 : vector<16x128xf32>
      %125 = arith.divf %123, %124 : vector<16x128xf32>
      %126 = arith.mulf %117, %99 : vector<16x128xf32>
      %127 = arith.mulf %111, %119 : vector<16x128xf32>
      %128 = arith.addf %126, %127 : vector<16x128xf32>
      %129 = math.tanh %128 : vector<16x128xf32>
      %130 = arith.mulf %125, %129 : vector<16x128xf32>
      %131 = arith.addi %3, %c2_i32 : i32
      %132 = vector.broadcast %131 : i32 to vector<16x128xi32>
      %133 = arith.cmpi slt, %132, %23 : vector<16x128xi32>
      %134 = arith.truncf %130 : vector<16x128xf32> to vector<16x128xbf16>
      %135 = arith.select %133, %134, %98 : vector<16x128xi1>, vector<16x128xbf16>
      %136 = arith.select %133, %128, %99 : vector<16x128xi1>, vector<16x128xf32>
      %c3_i32 = arith.constant 3 : i32
      %c16_i32_38 = arith.constant 16 : i32
      %137 = arith.muli %c3_i32, %c16_i32_38 : i32
      %138 = tpu.assume_multiple %137, 16 : i32
      %139 = arith.index_cast %138 : i32 to index
      %c0_39 = arith.constant 0 : index
      %140 = vector.load %arg13[%139, %c0_39] : memref<128x512xf32, #tpu.memory_space<vmem>>, vector<16x512xf32>
      %cst_40 = arith.constant dense<0.000000e+00> : vector<16x512xf32>
      %141 = tpu.matmul %135, %20, %cst_40 {dimension_numbers = #tpu.dot_dimension_numbers<[1], [0], [0], [1], [0, 0, 1, 1], [], []>} : vector<16x128xbf16>, vector<128x512xbf16>, vector<16x512xf32> -> vector<16x512xf32>
      %142 = arith.addf %140, %141 : vector<16x512xf32>
      %143 = vector.extract_strided_slice %142 {offsets = [0, 0], sizes = [16, 128], strides = [1, 1]} : vector<16x512xf32> to vector<16x128xf32>
      %144 = arith.negf %143 : vector<16x128xf32>
      %145 = math.exp %144 : vector<16x128xf32>
      %cst_41 = arith.constant 1.000000e+00 : f32
      %146 = vector.broadcast %cst_41 : f32 to vector<16x128xf32>
      %147 = arith.addf %146, %145 : vector<16x128xf32>
      %148 = arith.divf %146, %147 : vector<16x128xf32>
      %149 = vector.extract_strided_slice %142 {offsets = [0, 128], sizes = [16, 128], strides = [1, 1]} : vector<16x512xf32> to vector<16x128xf32>
      %150 = arith.negf %149 : vector<16x128xf32>
      %151 = math.exp %150 : vector<16x128xf32>
      %cst_42 = arith.constant 1.000000e+00 : f32
      %152 = vector.broadcast %cst_42 : f32 to vector<16x128xf32>
      %153 = arith.addf %152, %151 : vector<16x128xf32>
      %154 = arith.divf %152, %153 : vector<16x128xf32>
      %155 = vector.extract_strided_slice %142 {offsets = [0, 256], sizes = [16, 128], strides = [1, 1]} : vector<16x512xf32> to vector<16x128xf32>
      %156 = math.tanh %155 : vector<16x128xf32>
      %157 = vector.extract_strided_slice %142 {offsets = [0, 384], sizes = [16, 128], strides = [1, 1]} : vector<16x512xf32> to vector<16x128xf32>
      %158 = arith.negf %157 : vector<16x128xf32>
      %159 = math.exp %158 : vector<16x128xf32>
      %cst_43 = arith.constant 1.000000e+00 : f32
      %160 = vector.broadcast %cst_43 : f32 to vector<16x128xf32>
      %161 = arith.addf %160, %159 : vector<16x128xf32>
      %162 = arith.divf %160, %161 : vector<16x128xf32>
      %163 = arith.mulf %154, %136 : vector<16x128xf32>
      %164 = arith.mulf %148, %156 : vector<16x128xf32>
      %165 = arith.addf %163, %164 : vector<16x128xf32>
      %166 = math.tanh %165 : vector<16x128xf32>
      %167 = arith.mulf %162, %166 : vector<16x128xf32>
      %168 = arith.addi %3, %c3_i32 : i32
      %169 = vector.broadcast %168 : i32 to vector<16x128xi32>
      %170 = arith.cmpi slt, %169, %23 : vector<16x128xi32>
      %171 = arith.truncf %167 : vector<16x128xf32> to vector<16x128xbf16>
      %172 = arith.select %170, %171, %135 : vector<16x128xi1>, vector<16x128xbf16>
      %173 = arith.select %170, %165, %136 : vector<16x128xi1>, vector<16x128xf32>
      %c4_i32 = arith.constant 4 : i32
      %c16_i32_44 = arith.constant 16 : i32
      %174 = arith.muli %c4_i32, %c16_i32_44 : i32
      %175 = tpu.assume_multiple %174, 16 : i32
      %176 = arith.index_cast %175 : i32 to index
      %c0_45 = arith.constant 0 : index
      %177 = vector.load %arg13[%176, %c0_45] : memref<128x512xf32, #tpu.memory_space<vmem>>, vector<16x512xf32>
      %cst_46 = arith.constant dense<0.000000e+00> : vector<16x512xf32>
      %178 = tpu.matmul %172, %20, %cst_46 {dimension_numbers = #tpu.dot_dimension_numbers<[1], [0], [0], [1], [0, 0, 1, 1], [], []>} : vector<16x128xbf16>, vector<128x512xbf16>, vector<16x512xf32> -> vector<16x512xf32>
      %179 = arith.addf %177, %178 : vector<16x512xf32>
      %180 = vector.extract_strided_slice %179 {offsets = [0, 0], sizes = [16, 128], strides = [1, 1]} : vector<16x512xf32> to vector<16x128xf32>
      %181 = arith.negf %180 : vector<16x128xf32>
      %182 = math.exp %181 : vector<16x128xf32>
      %cst_47 = arith.constant 1.000000e+00 : f32
      %183 = vector.broadcast %cst_47 : f32 to vector<16x128xf32>
      %184 = arith.addf %183, %182 : vector<16x128xf32>
      %185 = arith.divf %183, %184 : vector<16x128xf32>
      %186 = vector.extract_strided_slice %179 {offsets = [0, 128], sizes = [16, 128], strides = [1, 1]} : vector<16x512xf32> to vector<16x128xf32>
      %187 = arith.negf %186 : vector<16x128xf32>
      %188 = math.exp %187 : vector<16x128xf32>
      %cst_48 = arith.constant 1.000000e+00 : f32
      %189 = vector.broadcast %cst_48 : f32 to vector<16x128xf32>
      %190 = arith.addf %189, %188 : vector<16x128xf32>
      %191 = arith.divf %189, %190 : vector<16x128xf32>
      %192 = vector.extract_strided_slice %179 {offsets = [0, 256], sizes = [16, 128], strides = [1, 1]} : vector<16x512xf32> to vector<16x128xf32>
      %193 = math.tanh %192 : vector<16x128xf32>
      %194 = vector.extract_strided_slice %179 {offsets = [0, 384], sizes = [16, 128], strides = [1, 1]} : vector<16x512xf32> to vector<16x128xf32>
      %195 = arith.negf %194 : vector<16x128xf32>
      %196 = math.exp %195 : vector<16x128xf32>
      %cst_49 = arith.constant 1.000000e+00 : f32
      %197 = vector.broadcast %cst_49 : f32 to vector<16x128xf32>
      %198 = arith.addf %197, %196 : vector<16x128xf32>
      %199 = arith.divf %197, %198 : vector<16x128xf32>
      %200 = arith.mulf %191, %173 : vector<16x128xf32>
      %201 = arith.mulf %185, %193 : vector<16x128xf32>
      %202 = arith.addf %200, %201 : vector<16x128xf32>
      %203 = math.tanh %202 : vector<16x128xf32>
      %204 = arith.mulf %199, %203 : vector<16x128xf32>
      %205 = arith.addi %3, %c4_i32 : i32
      %206 = vector.broadcast %205 : i32 to vector<16x128xi32>
      %207 = arith.cmpi slt, %206, %23 : vector<16x128xi32>
      %208 = arith.truncf %204 : vector<16x128xf32> to vector<16x128xbf16>
      %209 = arith.select %207, %208, %172 : vector<16x128xi1>, vector<16x128xbf16>
      %210 = arith.select %207, %202, %173 : vector<16x128xi1>, vector<16x128xf32>
      %c5_i32 = arith.constant 5 : i32
      %c16_i32_50 = arith.constant 16 : i32
      %211 = arith.muli %c5_i32, %c16_i32_50 : i32
      %212 = tpu.assume_multiple %211, 16 : i32
      %213 = arith.index_cast %212 : i32 to index
      %c0_51 = arith.constant 0 : index
      %214 = vector.load %arg13[%213, %c0_51] : memref<128x512xf32, #tpu.memory_space<vmem>>, vector<16x512xf32>
      %cst_52 = arith.constant dense<0.000000e+00> : vector<16x512xf32>
      %215 = tpu.matmul %209, %20, %cst_52 {dimension_numbers = #tpu.dot_dimension_numbers<[1], [0], [0], [1], [0, 0, 1, 1], [], []>} : vector<16x128xbf16>, vector<128x512xbf16>, vector<16x512xf32> -> vector<16x512xf32>
      %216 = arith.addf %214, %215 : vector<16x512xf32>
      %217 = vector.extract_strided_slice %216 {offsets = [0, 0], sizes = [16, 128], strides = [1, 1]} : vector<16x512xf32> to vector<16x128xf32>
      %218 = arith.negf %217 : vector<16x128xf32>
      %219 = math.exp %218 : vector<16x128xf32>
      %cst_53 = arith.constant 1.000000e+00 : f32
      %220 = vector.broadcast %cst_53 : f32 to vector<16x128xf32>
      %221 = arith.addf %220, %219 : vector<16x128xf32>
      %222 = arith.divf %220, %221 : vector<16x128xf32>
      %223 = vector.extract_strided_slice %216 {offsets = [0, 128], sizes = [16, 128], strides = [1, 1]} : vector<16x512xf32> to vector<16x128xf32>
      %224 = arith.negf %223 : vector<16x128xf32>
      %225 = math.exp %224 : vector<16x128xf32>
      %cst_54 = arith.constant 1.000000e+00 : f32
      %226 = vector.broadcast %cst_54 : f32 to vector<16x128xf32>
      %227 = arith.addf %226, %225 : vector<16x128xf32>
      %228 = arith.divf %226, %227 : vector<16x128xf32>
      %229 = vector.extract_strided_slice %216 {offsets = [0, 256], sizes = [16, 128], strides = [1, 1]} : vector<16x512xf32> to vector<16x128xf32>
      %230 = math.tanh %229 : vector<16x128xf32>
      %231 = vector.extract_strided_slice %216 {offsets = [0, 384], sizes = [16, 128], strides = [1, 1]} : vector<16x512xf32> to vector<16x128xf32>
      %232 = arith.negf %231 : vector<16x128xf32>
      %233 = math.exp %232 : vector<16x128xf32>
      %cst_55 = arith.constant 1.000000e+00 : f32
      %234 = vector.broadcast %cst_55 : f32 to vector<16x128xf32>
      %235 = arith.addf %234, %233 : vector<16x128xf32>
      %236 = arith.divf %234, %235 : vector<16x128xf32>
      %237 = arith.mulf %228, %210 : vector<16x128xf32>
      %238 = arith.mulf %222, %230 : vector<16x128xf32>
      %239 = arith.addf %237, %238 : vector<16x128xf32>
      %240 = math.tanh %239 : vector<16x128xf32>
      %241 = arith.mulf %236, %240 : vector<16x128xf32>
      %242 = arith.addi %3, %c5_i32 : i32
      %243 = vector.broadcast %242 : i32 to vector<16x128xi32>
      %244 = arith.cmpi slt, %243, %23 : vector<16x128xi32>
      %245 = arith.truncf %241 : vector<16x128xf32> to vector<16x128xbf16>
      %246 = arith.select %244, %245, %209 : vector<16x128xi1>, vector<16x128xbf16>
      %247 = arith.select %244, %239, %210 : vector<16x128xi1>, vector<16x128xf32>
      %c6_i32 = arith.constant 6 : i32
      %c16_i32_56 = arith.constant 16 : i32
      %248 = arith.muli %c6_i32, %c16_i32_56 : i32
      %249 = tpu.assume_multiple %248, 16 : i32
      %250 = arith.index_cast %249 : i32 to index
      %c0_57 = arith.constant 0 : index
      %251 = vector.load %arg13[%250, %c0_57] : memref<128x512xf32, #tpu.memory_space<vmem>>, vector<16x512xf32>
      %cst_58 = arith.constant dense<0.000000e+00> : vector<16x512xf32>
      %252 = tpu.matmul %246, %20, %cst_58 {dimension_numbers = #tpu.dot_dimension_numbers<[1], [0], [0], [1], [0, 0, 1, 1], [], []>} : vector<16x128xbf16>, vector<128x512xbf16>, vector<16x512xf32> -> vector<16x512xf32>
      %253 = arith.addf %251, %252 : vector<16x512xf32>
      %254 = vector.extract_strided_slice %253 {offsets = [0, 0], sizes = [16, 128], strides = [1, 1]} : vector<16x512xf32> to vector<16x128xf32>
      %255 = arith.negf %254 : vector<16x128xf32>
      %256 = math.exp %255 : vector<16x128xf32>
      %cst_59 = arith.constant 1.000000e+00 : f32
      %257 = vector.broadcast %cst_59 : f32 to vector<16x128xf32>
      %258 = arith.addf %257, %256 : vector<16x128xf32>
      %259 = arith.divf %257, %258 : vector<16x128xf32>
      %260 = vector.extract_strided_slice %253 {offsets = [0, 128], sizes = [16, 128], strides = [1, 1]} : vector<16x512xf32> to vector<16x128xf32>
      %261 = arith.negf %260 : vector<16x128xf32>
      %262 = math.exp %261 : vector<16x128xf32>
      %cst_60 = arith.constant 1.000000e+00 : f32
      %263 = vector.broadcast %cst_60 : f32 to vector<16x128xf32>
      %264 = arith.addf %263, %262 : vector<16x128xf32>
      %265 = arith.divf %263, %264 : vector<16x128xf32>
      %266 = vector.extract_strided_slice %253 {offsets = [0, 256], sizes = [16, 128], strides = [1, 1]} : vector<16x512xf32> to vector<16x128xf32>
      %267 = math.tanh %266 : vector<16x128xf32>
      %268 = vector.extract_strided_slice %253 {offsets = [0, 384], sizes = [16, 128], strides = [1, 1]} : vector<16x512xf32> to vector<16x128xf32>
      %269 = arith.negf %268 : vector<16x128xf32>
      %270 = math.exp %269 : vector<16x128xf32>
      %cst_61 = arith.constant 1.000000e+00 : f32
      %271 = vector.broadcast %cst_61 : f32 to vector<16x128xf32>
      %272 = arith.addf %271, %270 : vector<16x128xf32>
      %273 = arith.divf %271, %272 : vector<16x128xf32>
      %274 = arith.mulf %265, %247 : vector<16x128xf32>
      %275 = arith.mulf %259, %267 : vector<16x128xf32>
      %276 = arith.addf %274, %275 : vector<16x128xf32>
      %277 = math.tanh %276 : vector<16x128xf32>
      %278 = arith.mulf %273, %277 : vector<16x128xf32>
      %279 = arith.addi %3, %c6_i32 : i32
      %280 = vector.broadcast %279 : i32 to vector<16x128xi32>
      %281 = arith.cmpi slt, %280, %23 : vector<16x128xi32>
      %282 = arith.truncf %278 : vector<16x128xf32> to vector<16x128xbf16>
      %283 = arith.select %281, %282, %246 : vector<16x128xi1>, vector<16x128xbf16>
      %284 = arith.select %281, %276, %247 : vector<16x128xi1>, vector<16x128xf32>
      %c7_i32 = arith.constant 7 : i32
      %c16_i32_62 = arith.constant 16 : i32
      %285 = arith.muli %c7_i32, %c16_i32_62 : i32
      %286 = tpu.assume_multiple %285, 16 : i32
      %287 = arith.index_cast %286 : i32 to index
      %c0_63 = arith.constant 0 : index
      %288 = vector.load %arg13[%287, %c0_63] : memref<128x512xf32, #tpu.memory_space<vmem>>, vector<16x512xf32>
      %cst_64 = arith.constant dense<0.000000e+00> : vector<16x512xf32>
      %289 = tpu.matmul %283, %20, %cst_64 {dimension_numbers = #tpu.dot_dimension_numbers<[1], [0], [0], [1], [0, 0, 1, 1], [], []>} : vector<16x128xbf16>, vector<128x512xbf16>, vector<16x512xf32> -> vector<16x512xf32>
      %290 = arith.addf %288, %289 : vector<16x512xf32>
      %291 = vector.extract_strided_slice %290 {offsets = [0, 0], sizes = [16, 128], strides = [1, 1]} : vector<16x512xf32> to vector<16x128xf32>
      %292 = arith.negf %291 : vector<16x128xf32>
      %293 = math.exp %292 : vector<16x128xf32>
      %cst_65 = arith.constant 1.000000e+00 : f32
      %294 = vector.broadcast %cst_65 : f32 to vector<16x128xf32>
      %295 = arith.addf %294, %293 : vector<16x128xf32>
      %296 = arith.divf %294, %295 : vector<16x128xf32>
      %297 = vector.extract_strided_slice %290 {offsets = [0, 128], sizes = [16, 128], strides = [1, 1]} : vector<16x512xf32> to vector<16x128xf32>
      %298 = arith.negf %297 : vector<16x128xf32>
      %299 = math.exp %298 : vector<16x128xf32>
      %cst_66 = arith.constant 1.000000e+00 : f32
      %300 = vector.broadcast %cst_66 : f32 to vector<16x128xf32>
      %301 = arith.addf %300, %299 : vector<16x128xf32>
      %302 = arith.divf %300, %301 : vector<16x128xf32>
      %303 = vector.extract_strided_slice %290 {offsets = [0, 256], sizes = [16, 128], strides = [1, 1]} : vector<16x512xf32> to vector<16x128xf32>
      %304 = math.tanh %303 : vector<16x128xf32>
      %305 = vector.extract_strided_slice %290 {offsets = [0, 384], sizes = [16, 128], strides = [1, 1]} : vector<16x512xf32> to vector<16x128xf32>
      %306 = arith.negf %305 : vector<16x128xf32>
      %307 = math.exp %306 : vector<16x128xf32>
      %cst_67 = arith.constant 1.000000e+00 : f32
      %308 = vector.broadcast %cst_67 : f32 to vector<16x128xf32>
      %309 = arith.addf %308, %307 : vector<16x128xf32>
      %310 = arith.divf %308, %309 : vector<16x128xf32>
      %311 = arith.mulf %302, %284 : vector<16x128xf32>
      %312 = arith.mulf %296, %304 : vector<16x128xf32>
      %313 = arith.addf %311, %312 : vector<16x128xf32>
      %314 = math.tanh %313 : vector<16x128xf32>
      %315 = arith.mulf %310, %314 : vector<16x128xf32>
      %316 = arith.addi %3, %c7_i32 : i32
      %317 = vector.broadcast %316 : i32 to vector<16x128xi32>
      %318 = arith.cmpi slt, %317, %23 : vector<16x128xi32>
      %319 = arith.truncf %315 : vector<16x128xf32> to vector<16x128xbf16>
      %320 = arith.select %318, %319, %283 : vector<16x128xi1>, vector<16x128xbf16>
      %321 = arith.select %318, %313, %284 : vector<16x128xi1>, vector<16x128xf32>
      %c8_i32_68 = arith.constant 8 : i32
      %c0_69 = arith.constant 0 : index
      %c0_70 = arith.constant 0 : index
      %322 = vector.load %arg11[%c0_69, %c0_70] : memref<16x128xbf16, #tpu.memory_space<vmem>>, vector<16x128xbf16>
      tpu.vector_store %arg11[%c0_69, %c0_70], %320 {strides = array<i32>} : memref<16x128xbf16, #tpu.memory_space<vmem>>, vector<16x128xbf16>,
      %c0_71 = arith.constant 0 : index
      %c0_72 = arith.constant 0 : index
      %323 = vector.load %arg12[%c0_71, %c0_72] : memref<16x128xf32, #tpu.memory_space<vmem>>, vector<16x128xf32>
      tpu.vector_store %arg12[%c0_71, %c0_72], %321 {strides = array<i32>} : memref<16x128xf32, #tpu.memory_space<vmem>>, vector<16x128xf32>,
    } else {
    }
    %c0_i32_2 = arith.constant 0 : i32
    %9 = arith.cmpi eq, %arg1, %c0_i32_2 : i32
    %10 = arith.extui %9 : i1 to i32
    %c0_i32_3 = arith.constant 0 : i32
    %11 = arith.cmpi ne, %10, %c0_i32_3 : i32
    scf.if %11 {
      %c0 = arith.constant 0 : index
      %c0_4 = arith.constant 0 : index
      %12 = vector.load %arg11[%c0, %c0_4] : memref<16x128xbf16, #tpu.memory_space<vmem>>, vector<16x128xbf16>
      %c0_5 = arith.constant 0 : index
      %c0_6 = arith.constant 0 : index
      %13 = vector.load %arg8[%c0_5, %c0_6] : memref<128x128xbf16, #tpu.memory_space<vmem>>, vector<128x128xbf16>
      %cst = arith.constant dense<0.000000e+00> : vector<16x128xf32>
      %14 = tpu.matmul %12, %13, %cst {dimension_numbers = #tpu.dot_dimension_numbers<[1], [0], [0], [1], [0, 0, 1, 1], [], []>} : vector<16x128xbf16>, vector<128x128xbf16>, vector<16x128xf32> -> vector<16x128xf32>
      %c0_7 = arith.constant 0 : index
      %c0_8 = arith.constant 0 : index
      %15 = vector.load %arg9[%c0_7, %c0_8] : memref<1x128xf32, #tpu.memory_space<vmem>>, vector<1x128xf32>
      %16 = vector.broadcast %15 : vector<1x128xf32> to vector<16x128xf32>
      %17 = arith.addf %14, %16 : vector<16x128xf32>
      %cst_9 = arith.constant 0.000000e+00 : f32
      %18 = vector.broadcast %cst_9 : f32 to vector<16x128xf32>
      %19 = arith.maximumf %17, %18 : vector<16x128xf32>
      %20 = arith.truncf %19 : vector<16x128xf32> to vector<16x128xbf16>
      %c0_10 = arith.constant 0 : index
      %c0_11 = arith.constant 0 : index
      %21 = vector.load %arg10[%c0_10, %c0_11] : memref<16x128xbf16, #tpu.memory_space<vmem>>, vector<16x128xbf16>
      tpu.vector_store %arg10[%c0_10, %c0_11], %20 {strides = array<i32>} : memref<16x128xbf16, #tpu.memory_space<vmem>>, vector<16x128xbf16>,
    } else {
    }
    return
  }
  func.func @transform_0(%arg0: i32, %arg1: i32, %arg2: memref<1xi32, #tpu.memory_space<smem>>) -> (i32, i32) {
    %c0_i32 = arith.constant 0 : i32
    %c0_i32_0 = arith.constant 0 : i32
    return %arg0, %c0_i32 : i32, i32
  }
  func.func @transform_1(%arg0: i32, %arg1: i32, %arg2: memref<1xi32, #tpu.memory_space<smem>>) -> (i32, i32, i32) {
    %0 = arith.index_cast %arg0 : i32 to index
    %1 = memref.load %arg2[%0] : memref<1xi32, #tpu.memory_space<smem>>
    %c7_i32 = arith.constant 7 : i32
    %2 = arith.addi %1, %c7_i32 : i32
    %c8_i32 = arith.constant 8 : i32
    %3 = arith.divsi %2, %c8_i32 : i32
    %c1_i32 = arith.constant 1 : i32
    %4 = arith.subi %3, %c1_i32 : i32
    %c0_i32 = arith.constant 0 : i32
    %5 = arith.maxsi %4, %c0_i32 : i32
    %6 = arith.minsi %arg1, %5 : i32
    %c0_i32_0 = arith.constant 0 : i32
    %c0_i32_1 = arith.constant 0 : i32
    return %6, %arg0, %c0_i32_0 : i32, i32, i32
  }
  func.func @transform_2(%arg0: i32, %arg1: i32, %arg2: memref<1xi32, #tpu.memory_space<smem>>) -> (i32, i32) {
    %c0_i32 = arith.constant 0 : i32
    %c0_i32_0 = arith.constant 0 : i32
    %c0_i32_1 = arith.constant 0 : i32
    return %c0_i32, %c0_i32_0 : i32, i32
  }
  func.func @transform_3(%arg0: i32, %arg1: i32, %arg2: memref<1xi32, #tpu.memory_space<smem>>) -> (i32, i32) {
    %c0_i32 = arith.constant 0 : i32
    %c0_i32_0 = arith.constant 0 : i32
    %c0_i32_1 = arith.constant 0 : i32
    return %c0_i32, %c0_i32_0 : i32, i32
  }
  func.func @transform_4(%arg0: i32, %arg1: i32, %arg2: memref<1xi32, #tpu.memory_space<smem>>) -> (i32, i32) {
    %c0_i32 = arith.constant 0 : i32
    %c0_i32_0 = arith.constant 0 : i32
    %c0_i32_1 = arith.constant 0 : i32
    return %c0_i32, %c0_i32_0 : i32, i32
  }
  func.func @transform_5(%arg0: i32, %arg1: i32, %arg2: memref<1xi32, #tpu.memory_space<smem>>) -> (i32, i32) {
    %c0_i32 = arith.constant 0 : i32
    %c0_i32_0 = arith.constant 0 : i32
    %c0_i32_1 = arith.constant 0 : i32
    return %c0_i32, %c0_i32_0 : i32, i32
  }
  func.func @transform_6(%arg0: i32, %arg1: i32, %arg2: memref<1xi32, #tpu.memory_space<smem>>) -> (i32, i32) {
    %c0_i32 = arith.constant 0 : i32
    %c0_i32_0 = arith.constant 0 : i32
    %c0_i32_1 = arith.constant 0 : i32
    return %c0_i32, %c0_i32_0 : i32, i32
  }
  func.func @transform_7(%arg0: i32, %arg1: i32, %arg2: memref<1xi32, #tpu.memory_space<smem>>) -> (i32, i32) {
    %c0_i32 = arith.constant 0 : i32
    %c0_i32_0 = arith.constant 0 : i32
    return %arg0, %c0_i32 : i32, i32
  }
}

</mosaic_0001>

<llo_original>
// kernel: tpu_custom_call.1
$region0: #{tpu_custom_call.1}
  #allocation0 [shape = 'u32[]', space=smem, size = 0x4, offset = 0x4, fixed_abs, tag = 'smem constant byte address 0x4 - core index']
  #allocation1 [shape = 'u32[144,128]{1,0:T(1,128)}', space=vmem, size = 0x12000, scoped, tag = 'internal scratch']
  #allocation2 [shape = 'bf16[16,128]{1,0:T(16,128)(2,1)}', space=vmem, size = 0x1000, scoped, tag = 'scratch operand']
  #allocation3 [shape = 'f32[16,128]{1,0:T(8,128)}', space=vmem, size = 0x2000, scoped, tag = 'scratch operand']
  #allocation4 [shape = 'f32[128,512]{1,0:T(8,128)}', space=vmem, size = 0x40000, scoped, tag = 'scratch operand']
  #allocation5 [shape = 's32[1]{0}', space=sflag, size = 0x4, scoped, tag = 'scoped memory for tpu_custom_call.1']
  #allocation6 [shape = 's32[1]{0:T(128)S(6)}', space=smem, size = 0x200, scoped, tag = 'prefetched SMEM operand 0']
  %s0 = inlined_call_operand.<no memory space> [shape: s32[1], index: 0, kind: input, shape index: {}]
  %s1 = inlined_call_operand.vmem [shape: s32[16,1], index: 1, kind: input, shape index: {}]
  %s2 = inlined_call_operand.hbm [shape: bf16[8,16,32], index: 2, kind: input, shape index: {}]
  %s3 = inlined_call_operand.hbm [shape: bf16[32,512], index: 3, kind: input, shape index: {}]
  %s4 = inlined_call_operand.hbm [shape: bf16[128,512], index: 4, kind: input, shape index: {}]
  %s5 = inlined_call_operand.vmem [shape: f32[1,512], index: 5, kind: input, shape index: {}]
  %s6 = inlined_call_operand.hbm [shape: bf16[128,128], index: 6, kind: input, shape index: {}]
  %s7 = inlined_call_operand.vmem [shape: f32[1,128], index: 7, kind: input, shape index: {}]
  %s8 = inlined_call_operand.hbm [shape: bf16[16,128], index: 8, kind: output, shape index: {}]
  %s9 = sld [smem:[#allocation0]]
  $region66: #{tpu_custom_call.1} parent=0
    _
  %s11 = ssub.s32 1, %s9
  %s12 = scalar_select 0, %s11, %s9
  %13 = sst [smem:[#allocation6]] %s0
  $region1: #{tpu_custom_call.1} parent=0
    #allocation7 [shape = 'u8[32768]{0}', space=vmem, size = 0x8000, scoped, tag = 'input window, operand 2, single buffered']
    #allocation8 [shape = 's32[1]{0}', space=sflag, size = 0x4, scoped, tag = 'scoped memory for tpu_custom_call.1']
    #allocation9 [shape = 's32[1]{0}', space=sflag, size = 0x4, scoped, tag = 'scoped memory for tpu_custom_call.1']
    #allocation10 [shape = 'u8[32768]{0}', space=vmem, size = 0x8000, scoped, tag = 'input window, operand 3, single buffered']
    #allocation11 [shape = 's32[1]{0}', space=sflag, size = 0x4, scoped, tag = 'scoped memory for tpu_custom_call.1']
    #allocation12 [shape = 'u8[131072]{0}', space=vmem, size = 0x20000, scoped, tag = 'input window, operand 4, single buffered']
    #allocation13 [shape = 'u8[32768]{0}', space=vmem, size = 0x8000, scoped, tag = 'input window, operand 6, single buffered']
    #allocation14 [shape = 's32[1]{0}', space=sflag, size = 0x4, scoped, tag = 'scoped memory for tpu_custom_call.1']
    #allocation15 [shape = 'u8[4096]{0}', space=vmem, size = 0x1000, scoped, tag = 'output window, operand 0, single buffered']
    %14 = vsyncpa [#allocation8], 0
    %15 = vsyncpa [#allocation11], 0
    %16 = vsyncpa [#allocation14], 0
    %17 = vsyncpa [#allocation9], 0
    // Predicated region
    $region2: #{tpu_custom_call.1} parent=1 // pred_check
      _
    $region3: #{tpu_custom_call.1} parent=1 // pred_check_branch
      %19 = sbr.rel (0) target = $region5
    $region4: #{tpu_custom_call.1} parent=1 // pred_region
      _
    $region5: #{tpu_custom_call.1} parent=1 // pred_fallthru
      _
    // Predicated region
    $region6: #{tpu_custom_call.1} parent=1 // pred_check
      _
    $region7: #{tpu_custom_call.1} parent=1 // pred_check_branch
      %21 = sbr.rel (0) target = $region9
    $region8: #{tpu_custom_call.1} parent=1 // pred_region
      %s22 = sld [smem:[#allocation6]]
      %s23 = sadd.s32 %s22, 7
      %p24 = scmp.lt.s32.totalorder %s23, 0
      %s25 = ssub.s32 0, %s23
      %s26 = scalar_select %p24, %s25, %s23
      %s27 = sshrl.u32 %s26, 3
      %s28 = ssub.s32 0, %s27
      %s29 = scalar_select %p24, %s28, %s27
      %s30 = ssub.s32 %s29, 1
      %p31 = scmp.gt.s32.totalorder %s30, 0
      %s32 = scalar_select %p31, %s30, 0
      %p33 = scmp.lt.s32.totalorder 0, %s32
      %s34 = scalar_select %p33, 0, %s32
      %s35 = smul.u32 8, %s34
      %s37 = ssub.s32 1024, 1024
      %38 = vsyncadd [#allocation8], %s37
      %s39 = smul.addr %s35, 2
      %s40 = smul.addr %s39, 64
      %s41 = scalar_lea.hbm %s2, %s40
      %s42 = sshll.u32 [#allocation7], 4
      %s43 = int_to_ptr.vmem [resolvable:$true] %s42
      %48 = dma.hbm_to_vmem [thread:$0]  %s41, 1024, %s43, [#allocation8], 64, 64, 4
    $region9: #{tpu_custom_call.1} parent=1 // pred_fallthru
      _
    // Predicated region
    $region10: #{tpu_custom_call.1} parent=1 // pred_check
      _
    $region11: #{tpu_custom_call.1} parent=1 // pred_check_branch
      %50 = sbr.rel (0) target = $region13
    $region12: #{tpu_custom_call.1} parent=1 // pred_region
      %s52 = ssub.s32 1024, 1024
      %53 = vsyncadd [#allocation11], %s52
      %s54 = sshll.u32 [#allocation10], 4
      %s55 = int_to_ptr.vmem [resolvable:$true] %s54
      %60 = dma.hbm_to_vmem [thread:$0]  %s3, 1024, %s55, [#allocation11], 256, 256, 16
    $region13: #{tpu_custom_call.1} parent=1 // pred_fallthru
      _
    // Predicated region
    $region14: #{tpu_custom_call.1} parent=1 // pred_check
      _
    $region15: #{tpu_custom_call.1} parent=1 // pred_check_branch
      %62 = sbr.rel (0) target = $region17
    $region16: #{tpu_custom_call.1} parent=1 // pred_region
      %s64 = ssub.s32 4096, 4096
      %65 = vsyncadd [#allocation11], %s64
      %s66 = sshll.u32 [#allocation12], 4
      %s67 = int_to_ptr.vmem [resolvable:$true] %s66
      %72 = dma.hbm_to_vmem [thread:$0]  %s4, 4096, %s67, [#allocation11], 256, 256, 16
    $region17: #{tpu_custom_call.1} parent=1 // pred_fallthru
      _
    // Predicated region
    $region18: #{tpu_custom_call.1} parent=1 // pred_check
      _
    $region19: #{tpu_custom_call.1} parent=1 // pred_check_branch
      %74 = sbr.rel (0) target = $region21
    $region20: #{tpu_custom_call.1} parent=1 // pred_region
      _
    $region21: #{tpu_custom_call.1} parent=1 // pred_fallthru
      _
    // Predicated region
    $region22: #{tpu_custom_call.1} parent=1 // pred_check
      _
    $region23: #{tpu_custom_call.1} parent=1 // pred_check_branch
      %76 = sbr.rel (0) target = $region25
    $region24: #{tpu_custom_call.1} parent=1 // pred_region
      %s78 = ssub.s32 1024, 1024
      %79 = vsyncadd [#allocation14], %s78
      %s80 = sshll.u32 [#allocation13], 4
      %s81 = int_to_ptr.vmem [resolvable:$true] %s80
      %86 = dma.hbm_to_vmem [thread:$0]  %s6, 1024, %s81, [#allocation14], 64, 64, 4
    $region25: #{tpu_custom_call.1} parent=1 // pred_fallthru
      _
    // Predicated region
    $region26: #{tpu_custom_call.1} parent=1 // pred_check
      _
    $region27: #{tpu_custom_call.1} parent=1 // pred_check_branch
      %88 = sbr.rel (0) target = $region29
    $region28: #{tpu_custom_call.1} parent=1 // pred_region
      _
    $region29: #{tpu_custom_call.1} parent=1 // pred_fallthru
      _
    // Predicated region
    $region30: #{tpu_custom_call.1} parent=1 // pred_check
      _
    $region31: #{tpu_custom_call.1} parent=1 // pred_check_branch
      %90 = sbr.rel (0) target = $region33
    $region32: #{tpu_custom_call.1} parent=1 // pred_region
      %91 = dma.done [#allocation8], 1024
    $region33: #{tpu_custom_call.1} parent=1 // pred_fallthru
      _
    // Predicated region
    $region34: #{tpu_custom_call.1} parent=1 // pred_check
      _
    $region35: #{tpu_custom_call.1} parent=1 // pred_check_branch
      %93 = sbr.rel (0) target = $region37
    $region36: #{tpu_custom_call.1} parent=1 // pred_region
      %94 = dma.done [#allocation11], 1024
    $region37: #{tpu_custom_call.1} parent=1 // pred_fallthru
      _
    // Predicated region
    $region38: #{tpu_custom_call.1} parent=1 // pred_check
      _
    $region39: #{tpu_custom_call.1} parent=1 // pred_check_branch
      %96 = sbr.rel (0) target = $region41
    $region40: #{tpu_custom_call.1} parent=1 // pred_region
      %97 = dma.done [#allocation11], 4096
    $region41: #{tpu_custom_call.1} parent=1 // pred_fallthru
      _
    // Predicated region
    $region42: #{tpu_custom_call.1} parent=1 // pred_check
      _
    $region43: #{tpu_custom_call.1} parent=1 // pred_check_branch
      %99 = sbr.rel (0) target = $region45
    $region44: #{tpu_custom_call.1} parent=1 // pred_region
      %100 = dma.done [#allocation14], 1024
    $region45: #{tpu_custom_call.1} parent=1 // pred_fallthru
      _
    %s101 = sld [smem:[#allocation6]]
    %s102 = sadd.s32 %s101, 7
    %p103 = scmp.lt.s32.totalorder %s102, 0
    %s104 = ssub.s32 0, %s102
    %s105 = scalar_select %p103, %s104, %s102
    %s106 = sshrl.u32 %s105, 3
    %s107 = ssub.s32 0, %s106
    %s108 = scalar_select %p103, %s107, %s106
    %s109 = ssub.s32 %s108, 1
    %p110 = scmp.gt.s32.totalorder %s109, 0
    %s111 = scalar_select %p110, %s109, 0
    %p112 = scmp.lt.s32.totalorder 0, %s111
    %s113 = scalar_select %p112, 0, %s111
    %s114 = smul.u32 8, %s113
    %p118 = scmp.eq.s32.totalorder 0, 0
    // Predicated region
    $region46: #{tpu_custom_call.1} parent=1 // pred_check
      %p119 = pneg %p118
    $region47: #{tpu_custom_call.1} parent=1 // pred_check_branch
      %121 = sbr.rel (%p119) target = $region49
    $region48: #{tpu_custom_call.1} parent=1 // pred_region
      %122 = vst [vmem:[#allocation2] sm:$0xff] 0
      %123 = vst [vmem:[#allocation3] sm:$0xff] 0.0
      %124 = vst [vmem:[#allocation3 + $0x8] sm:$0xff] 0.0
    $region49: #{tpu_custom_call.1} parent=1 // pred_fallthru
      _
    %s125 = smul.u32 0, 8
    %s126 = sld [smem:[#allocation6]]
    %p127 = scmp.lt.s32.totalorder %s125, %s126
    // Predicated region
    $region50: #{tpu_custom_call.1} parent=1 // pred_check
      %p128 = pneg %p127
    $region51: #{tpu_custom_call.1} parent=1 // pred_check_branch
      %130 = sbr.rel (%p128) target = $region53
    $region52: #{tpu_custom_call.1} parent=1 // pred_region
      %v131 = vld [vmem:[#allocation7] sm:$0xf]
      %v132 = vld [vmem:[#allocation7 + $0x4] sm:$0xf]
      %v133 = vld [vmem:[#allocation7 + $0x8] sm:$0xf]
      %v134 = vld [vmem:[#allocation7 + $0xc] sm:$0xf]
      %v135 = vld [vmem:[#allocation7 + $0x10] sm:$0xf]
      %v136 = vld [vmem:[#allocation7 + $0x14] sm:$0xf]
      %v137 = vld [vmem:[#allocation7 + $0x18] sm:$0xf]
      %v138 = vld [vmem:[#allocation7 + $0x1c] sm:$0xf]
      %v139 = vld [vmem:[#allocation7 + $0x20] sm:$0xf]
      %v140 = vld [vmem:[#allocation7 + $0x24] sm:$0xf]
      %v141 = vld [vmem:[#allocation7 + $0x28] sm:$0xf]
      %v142 = vld [vmem:[#allocation7 + $0x2c] sm:$0xf]
      %v143 = vld [vmem:[#allocation7 + $0x30] sm:$0xf]
      %v144 = vld [vmem:[#allocation7 + $0x34] sm:$0xf]
      %v145 = vld [vmem:[#allocation7 + $0x38] sm:$0xf]
      %v146 = vld [vmem:[#allocation7 + $0x3c] sm:$0xf]
      %v147 = vld [vmem:[#allocation10] sm:$0xff]
      %v148 = vld [vmem:[#allocation10 + $0x8] sm:$0xff]
      %v149 = vld [vmem:[#allocation10 + $0x10] sm:$0xff]
      %v150 = vld [vmem:[#allocation10 + $0x18] sm:$0xff]
      %v151 = vld [vmem:[#allocation10 + $0x20] sm:$0xff]
      %v152 = vld [vmem:[#allocation10 + $0x28] sm:$0xff]
      %v153 = vld [vmem:[#allocation10 + $0x30] sm:$0xff]
      %v154 = vld [vmem:[#allocation10 + $0x38] sm:$0xff]
      %v155 = vld [vmem:[%s5] sm:$0xf]
      %v157 = vlaneseq
      %v158 = vshrl.u32 %v157, 7
      %v159 = vsub.s32 0, %v158
      %v160 = vrot.slane %v155, %v159
      %v161 = vlaneseq
      %v162 = vshrl.u32 %v161, 7
      %v163 = vsub.s32 1, %v162
      %v164 = vrot.slane %v155, %v163
      %v165 = vlaneseq
      %v166 = vshrl.u32 %v165, 7
      %v167 = vsub.s32 2, %v166
      %v168 = vrot.slane %v155, %v167
      %v169 = vlaneseq
      %v170 = vshrl.u32 %v169, 7
      %v171 = vsub.s32 3, %v170
      %v172 = vrot.slane %v155, %v171
      %v193 = vunpack.c.l.b16 %v131
      %v194 = vunpack.c.l.b16 %v132
      %v195 = vunpack.c.l.b16 %v133
      %v196 = vunpack.c.l.b16 %v134
      %v197 = vunpack.c.l.b16 %v135
      %v198 = vunpack.c.l.b16 %v136
      %v199 = vunpack.c.l.b16 %v137
      %v200 = vunpack.c.l.b16 %v138
      %v201 = vunpack.c.l.b16 %v139
      %v202 = vunpack.c.l.b16 %v140
      %v203 = vunpack.c.l.b16 %v141
      %v204 = vunpack.c.l.b16 %v142
      %v205 = vunpack.c.l.b16 %v143
      %v206 = vunpack.c.l.b16 %v144
      %v207 = vunpack.c.l.b16 %v145
      %v208 = vunpack.c.l.b16 %v146
      %v209 = vpack.c.b16 %v194, %v193
      %v210 = vpack.c.b16 %v196, %v195
      %v211 = vpack.c.b16 %v198, %v197
      %v212 = vpack.c.b16 %v200, %v199
      %v213 = vpack.c.b16 %v202, %v201
      %v214 = vpack.c.b16 %v204, %v203
      %v215 = vpack.c.b16 %v206, %v205
      %v216 = vpack.c.b16 %v208, %v207
      %v225 = vunpack.c.l.b16 %v147
      %v226 = vunpack.c.h.b16 %v147
      %v227 = vunpack.c.l.b16 %v148
      %v228 = vunpack.c.h.b16 %v148
      %v229 = vunpack.c.l.b16 %v149
      %v230 = vunpack.c.h.b16 %v149
      %v231 = vunpack.c.l.b16 %v150
      %v232 = vunpack.c.h.b16 %v150
      %v233 = vunpack.c.l.b16 %v151
      %v234 = vunpack.c.h.b16 %v151
      %v235 = vunpack.c.l.b16 %v152
      %v236 = vunpack.c.h.b16 %v152
      %v237 = vunpack.c.l.b16 %v153
      %v238 = vunpack.c.h.b16 %v153
      %v239 = vunpack.c.l.b16 %v154
      %v240 = vunpack.c.h.b16 %v154
      %v241 = vpack.c.b16 %v229, %v225
      %v242 = vpack.c.b16 %v230, %v226
      %v243 = vpack.c.b16 %v231, %v227
      %v244 = vpack.c.b16 %v232, %v228
      %v245 = vpack.c.b16 %v237, %v233
      %v246 = vpack.c.b16 %v238, %v234
      %v247 = vpack.c.b16 %v239, %v235
      %v248 = vpack.c.b16 %v240, %v236
      %vm257 = vcmask 261120
      %v259 = vsel %vm257, %v209, 0
      %v262 = vsel %vm257, %v210, 0
      %v265 = vsel %vm257, %v211, 0
      %v268 = vsel %vm257, %v212, 0
      %v271 = vsel %vm257, %v213, 0
      %v274 = vsel %vm257, %v214, 0
      %v277 = vsel %vm257, %v215, 0
      %v280 = vsel %vm257, %v216, 0
      %282 = vmatprep.subr.bf16.mxu0 %v242
      %283 = vmatpush1.bf16.msra.mxu0 %v241
      %284 = vmatprep.subr.bf16.mxu0 %v246
      %285 = vmatpush1.bf16.msra.mxu0 %v245
      %286 = vmatprep.subr.bf16.mxu0 0
      %287 = vmatpush1.bf16.msra.mxu0 0
      %288 = vmatprep.subr.bf16.mxu0 0
      %289 = vmatpush1.bf16.msra.mxu0 0
      %290 = vmatprep.subr.bf16.mxu0 0
      %291 = vmatpush1.bf16.msra.mxu0 0
      %292 = vmatprep.subr.bf16.mxu0 0
      %293 = vmatpush1.bf16.msra.mxu0 0
      %294 = vmatprep.subr.bf16.mxu0 0
      %295 = vmatpush1.bf16.msra.mxu0 0
      %296 = vmatprep.subr.bf16.mxu0 0
      %297 = vmatpush1.bf16.msra.mxu0 0
      %298 = vmatprep.subr.bf16.mxu0 0
      %299 = vmatpush1.bf16.msra.mxu0 0
      %300 = vmatprep.subr.bf16.mxu0 0
      %301 = vmatpush1.bf16.msra.mxu0 0
      %302 = vmatprep.subr.bf16.mxu0 0
      %303 = vmatpush1.bf16.msra.mxu0 0
      %304 = vmatprep.subr.bf16.mxu0 0
      %305 = vmatpush1.bf16.msra.mxu0 0
      %306 = vmatprep.subr.bf16.mxu0 0
      %307 = vmatpush1.bf16.msra.mxu0 0
      %308 = vmatprep.subr.bf16.mxu0 0
      %309 = vmatpush1.bf16.msra.mxu0 0
      %310 = vmatprep.subr.bf16.mxu0 0
      %311 = vmatpush1.bf16.msra.mxu0 0
      %312 = vmatprep.subr.bf16.mxu0 0
      %313 = vmatpush1.bf16.msra.mxu0 0
      %314 = vmatprep.mubr.bf16.mxu0 0
      %315 = vmatmul.mubr.bf16.gmra.mrb[0].mxu0 %v259
      %v316 = vpop.f32.mrb[0].mxu0
      %v317 = vadd.f32 %v160, %v316
      %v318 = vpop.f32.mrb[0].mxu0
      %v319 = vadd.f32 %v164, %v318
      %v320 = vpop.f32.mrb[0].mxu0
      %v321 = vadd.f32 %v160, %v320
      %v322 = vpop.f32.mrb[0].mxu0
      %v323 = vadd.f32 %v164, %v322
      %324 = vmatprep.mubr.bf16.mxu0 0
      %325 = vmatmul.mubr.bf16.gmra.mrb[0].mxu0 %v262
      %v326 = vpop.f32.mrb[0].mxu0
      %v327 = vadd.f32 %v160, %v326
      %v328 = vpop.f32.mrb[0].mxu0
      %v329 = vadd.f32 %v164, %v328
      %v330 = vpop.f32.mrb[0].mxu0
      %v331 = vadd.f32 %v160, %v330
      %v332 = vpop.f32.mrb[0].mxu0
      %v333 = vadd.f32 %v164, %v332
      %334 = vmatprep.mubr.bf16.mxu0 0
      %335 = vmatmul.mubr.bf16.gmra.mrb[0].mxu0 %v265
      %v336 = vpop.f32.mrb[0].mxu0
      %v337 = vadd.f32 %v160, %v336
      %v338 = vpop.f32.mrb[0].mxu0
      %v339 = vadd.f32 %v164, %v338
      %v340 = vpop.f32.mrb[0].mxu0
      %v341 = vadd.f32 %v160, %v340
      %v342 = vpop.f32.mrb[0].mxu0
      %v343 = vadd.f32 %v164, %v342
      %344 = vmatprep.mubr.bf16.mxu0 0
      %345 = vmatmul.mubr.bf16.gmra.mrb[0].mxu0 %v268
      %v346 = vpop.f32.mrb[0].mxu0
      %v347 = vadd.f32 %v160, %v346
      %v348 = vpop.f32.mrb[0].mxu0
      %v349 = vadd.f32 %v164, %v348
      %v350 = vpop.f32.mrb[0].mxu0
      %v351 = vadd.f32 %v160, %v350
      %v352 = vpop.f32.mrb[0].mxu0
      %v353 = vadd.f32 %v164, %v352
      %354 = vmatprep.mubr.bf16.mxu0 0
      %355 = vmatmul.mubr.bf16.gmra.mrb[0].mxu0 %v271
      %v356 = vpop.f32.mrb[0].mxu0
      %v357 = vadd.f32 %v160, %v356
      %v358 = vpop.f32.mrb[0].mxu0
      %v359 = vadd.f32 %v164, %v358
      %v360 = vpop.f32.mrb[0].mxu0
      %v361 = vadd.f32 %v160, %v360
      %v362 = vpop.f32.mrb[0].mxu0
      %v363 = vadd.f32 %v164, %v362
      %364 = vmatprep.mubr.bf16.mxu0 0
      %365 = vmatmul.mubr.bf16.gmra.mrb[0].mxu0 %v274
      %v366 = vpop.f32.mrb[0].mxu0
      %v367 = vadd.f32 %v160, %v366
      %v368 = vpop.f32.mrb[0].mxu0
      %v369 = vadd.f32 %v164, %v368
      %v370 = vpop.f32.mrb[0].mxu0
      %v371 = vadd.f32 %v160, %v370
      %v372 = vpop.f32.mrb[0].mxu0
      %v373 = vadd.f32 %v164, %v372
      %374 = vmatprep.mubr.bf16.mxu0 0
      %375 = vmatmul.mubr.bf16.gmra.mrb[0].mxu0 %v277
      %v376 = vpop.f32.mrb[0].mxu0
      %v377 = vadd.f32 %v160, %v376
      %v378 = vpop.f32.mrb[0].mxu0
      %v379 = vadd.f32 %v164, %v378
      %v380 = vpop.f32.mrb[0].mxu0
      %v381 = vadd.f32 %v160, %v380
      %v382 = vpop.f32.mrb[0].mxu0
      %v383 = vadd.f32 %v164, %v382
      %384 = vmatprep.mubr.bf16.mxu0 0
      %385 = vmatmul.mubr.bf16.gmra.mrb[0].mxu0 %v280
      %v386 = vpop.f32.mrb[0].mxu0
      %v387 = vadd.f32 %v160, %v386
      %v388 = vpop.f32.mrb[0].mxu0
      %v389 = vadd.f32 %v164, %v388
      %v390 = vpop.f32.mrb[0].mxu0
      %v391 = vadd.f32 %v160, %v390
      %v392 = vpop.f32.mrb[0].mxu0
      %v393 = vadd.f32 %v164, %v392
      %394 = vdwg.mxu0
      %395 = vmatprep.subr.bf16.mxu0 %v244
      %396 = vmatpush1.bf16.msra.mxu0 %v243
      %397 = vmatprep.subr.bf16.mxu0 %v248
      %398 = vmatpush1.bf16.msra.mxu0 %v247
      %399 = vmatprep.subr.bf16.mxu0 0
      %400 = vmatpush1.bf16.msra.mxu0 0
      %401 = vmatprep.subr.bf16.mxu0 0
      %402 = vmatpush1.bf16.msra.mxu0 0
      %403 = vmatprep.subr.bf16.mxu0 0
      %404 = vmatpush1.bf16.msra.mxu0 0
      %405 = vmatprep.subr.bf16.mxu0 0
      %406 = vmatpush1.bf16.msra.mxu0 0
      %407 = vmatprep.subr.bf16.mxu0 0
      %408 = vmatpush1.bf16.msra.mxu0 0
      %409 = vmatprep.subr.bf16.mxu0 0
      %410 = vmatpush1.bf16.msra.mxu0 0
      %411 = vmatprep.subr.bf16.mxu0 0
      %412 = vmatpush1.bf16.msra.mxu0 0
      %413 = vmatprep.subr.bf16.mxu0 0
      %414 = vmatpush1.bf16.msra.mxu0 0
      %415 = vmatprep.subr.bf16.mxu0 0
      %416 = vmatpush1.bf16.msra.mxu0 0
      %417 = vmatprep.subr.bf16.mxu0 0
      %418 = vmatpush1.bf16.msra.mxu0 0
      %419 = vmatprep.subr.bf16.mxu0 0
      %420 = vmatpush1.bf16.msra.mxu0 0
      %421 = vmatprep.subr.bf16.mxu0 0
      %422 = vmatpush1.bf16.msra.mxu0 0
      %423 = vmatprep.subr.bf16.mxu0 0
      %424 = vmatpush1.bf16.msra.mxu0 0
      %425 = vmatprep.subr.bf16.mxu0 0
      %426 = vmatpush1.bf16.msra.mxu0 0
      %427 = vmatprep.mubr.bf16.mxu0 0
      %428 = vmatmul.mubr.bf16.gmra.mrb[0].mxu0 %v259
      %v429 = vpop.f32.mrb[0].mxu0
      %v430 = vadd.f32 %v168, %v429
      %v431 = vpop.f32.mrb[0].mxu0
      %v432 = vadd.f32 %v172, %v431
      %v433 = vpop.f32.mrb[0].mxu0
      %v434 = vadd.f32 %v168, %v433
      %v435 = vpop.f32.mrb[0].mxu0
      %v436 = vadd.f32 %v172, %v435
      %437 = vmatprep.mubr.bf16.mxu0 0
      %438 = vmatmul.mubr.bf16.gmra.mrb[0].mxu0 %v262
      %v439 = vpop.f32.mrb[0].mxu0
      %v440 = vadd.f32 %v168, %v439
      %v441 = vpop.f32.mrb[0].mxu0
      %v442 = vadd.f32 %v172, %v441
      %v443 = vpop.f32.mrb[0].mxu0
      %v444 = vadd.f32 %v168, %v443
      %v445 = vpop.f32.mrb[0].mxu0
      %v446 = vadd.f32 %v172, %v445
      %447 = vmatprep.mubr.bf16.mxu0 0
      %448 = vmatmul.mubr.bf16.gmra.mrb[0].mxu0 %v265
      %v449 = vpop.f32.mrb[0].mxu0
      %v450 = vadd.f32 %v168, %v449
      %v451 = vpop.f32.mrb[0].mxu0
      %v452 = vadd.f32 %v172, %v451
      %v453 = vpop.f32.mrb[0].mxu0
      %v454 = vadd.f32 %v168, %v453
      %v455 = vpop.f32.mrb[0].mxu0
      %v456 = vadd.f32 %v172, %v455
      %457 = vmatprep.mubr.bf16.mxu0 0
      %458 = vmatmul.mubr.bf16.gmra.mrb[0].mxu0 %v268
      %v459 = vpop.f32.mrb[0].mxu0
      %v460 = vadd.f32 %v168, %v459
      %v461 = vpop.f32.mrb[0].mxu0
      %v462 = vadd.f32 %v172, %v461
      %v463 = vpop.f32.mrb[0].mxu0
      %v464 = vadd.f32 %v168, %v463
      %v465 = vpop.f32.mrb[0].mxu0
      %v466 = vadd.f32 %v172, %v465
      %467 = vmatprep.mubr.bf16.mxu0 0
      %468 = vmatmul.mubr.bf16.gmra.mrb[0].mxu0 %v271
      %v469 = vpop.f32.mrb[0].mxu0
      %v470 = vadd.f32 %v168, %v469
      %v471 = vpop.f32.mrb[0].mxu0
      %v472 = vadd.f32 %v172, %v471
      %v473 = vpop.f32.mrb[0].mxu0
      %v474 = vadd.f32 %v168, %v473
      %v475 = vpop.f32.mrb[0].mxu0
      %v476 = vadd.f32 %v172, %v475
      %477 = vmatprep.mubr.bf16.mxu0 0
      %478 = vmatmul.mubr.bf16.gmra.mrb[0].mxu0 %v274
      %v479 = vpop.f32.mrb[0].mxu0
      %v480 = vadd.f32 %v168, %v479
      %v481 = vpop.f32.mrb[0].mxu0
      %v482 = vadd.f32 %v172, %v481
      %v483 = vpop.f32.mrb[0].mxu0
      %v484 = vadd.f32 %v168, %v483
      %v485 = vpop.f32.mrb[0].mxu0
      %v486 = vadd.f32 %v172, %v485
      %487 = vmatprep.mubr.bf16.mxu0 0
      %488 = vmatmul.mubr.bf16.gmra.mrb[0].mxu0 %v277
      %v489 = vpop.f32.mrb[0].mxu0
      %v490 = vadd.f32 %v168, %v489
      %v491 = vpop.f32.mrb[0].mxu0
      %v492 = vadd.f32 %v172, %v491
      %v493 = vpop.f32.mrb[0].mxu0
      %v494 = vadd.f32 %v168, %v493
      %v495 = vpop.f32.mrb[0].mxu0
      %v496 = vadd.f32 %v172, %v495
      %497 = vmatprep.mubr.bf16.mxu0 0
      %498 = vmatmul.mubr.bf16.gmra.mrb[0].mxu0 %v280
      %v499 = vpop.f32.mrb[0].mxu0
      %v500 = vadd.f32 %v168, %v499
      %v501 = vpop.f32.mrb[0].mxu0
      %v502 = vadd.f32 %v172, %v501
      %v503 = vpop.f32.mrb[0].mxu0
      %v504 = vadd.f32 %v168, %v503
      %v505 = vpop.f32.mrb[0].mxu0
      %v506 = vadd.f32 %v172, %v505
      %507 = vdwg.mxu0
      %508 = vst [vmem:[#allocation4] sm:$0xff] %v317
      %509 = vst [vmem:[#allocation4 + $0x8] sm:$0xff] %v319
      %510 = vst [vmem:[#allocation4 + $0x10] sm:$0xff] %v430
      %511 = vst [vmem:[#allocation4 + $0x18] sm:$0xff] %v432
      %512 = vst [vmem:[#allocation4 + $0x20] sm:$0xff] %v321
      %513 = vst [vmem:[#allocation4 + $0x28] sm:$0xff] %v323
      %514 = vst [vmem:[#allocation4 + $0x30] sm:$0xff] %v434
      %515 = vst [vmem:[#allocation4 + $0x38] sm:$0xff] %v436
      %516 = vst [vmem:[#allocation4 + $0x40] sm:$0xff] %v327
      %517 = vst [vmem:[#allocation4 + $0x48] sm:$0xff] %v329
      %518 = vst [vmem:[#allocation4 + $0x50] sm:$0xff] %v440
      %519 = vst [vmem:[#allocation4 + $0x58] sm:$0xff] %v442
      %520 = vst [vmem:[#allocation4 + $0x60] sm:$0xff] %v331
      %521 = vst [vmem:[#allocation4 + $0x68] sm:$0xff] %v333
      %522 = vst [vmem:[#allocation4 + $0x70] sm:$0xff] %v444
      %523 = vst [vmem:[#allocation4 + $0x78] sm:$0xff] %v446
      %524 = vst [vmem:[#allocation4 + $0x80] sm:$0xff] %v337
      %525 = vst [vmem:[#allocation4 + $0x88] sm:$0xff] %v339
      %526 = vst [vmem:[#allocation4 + $0x90] sm:$0xff] %v450
      %527 = vst [vmem:[#allocation4 + $0x98] sm:$0xff] %v452
      %528 = vst [vmem:[#allocation4 + $0xa0] sm:$0xff] %v341
      %529 = vst [vmem:[#allocation4 + $0xa8] sm:$0xff] %v343
      %530 = vst [vmem:[#allocation4 + $0xb0] sm:$0xff] %v454
      %531 = vst [vmem:[#allocation4 + $0xb8] sm:$0xff] %v456
      %532 = vst [vmem:[#allocation4 + $0xc0] sm:$0xff] %v347
      %533 = vst [vmem:[#allocation4 + $0xc8] sm:$0xff] %v349
      %534 = vst [vmem:[#allocation4 + $0xd0] sm:$0xff] %v460
      %535 = vst [vmem:[#allocation4 + $0xd8] sm:$0xff] %v462
      %536 = vst [vmem:[#allocation4 + $0xe0] sm:$0xff] %v351
      %537 = vst [vmem:[#allocation4 + $0xe8] sm:$0xff] %v353
      %538 = vst [vmem:[#allocation4 + $0xf0] sm:$0xff] %v464
      %539 = vst [vmem:[#allocation4 + $0xf8] sm:$0xff] %v466
      %540 = vst [vmem:[#allocation4 + $0x100] sm:$0xff] %v357
      %541 = vst [vmem:[#allocation4 + $0x108] sm:$0xff] %v359
      %542 = vst [vmem:[#allocation4 + $0x110] sm:$0xff] %v470
      %543 = vst [vmem:[#allocation4 + $0x118] sm:$0xff] %v472
      %544 = vst [vmem:[#allocation4 + $0x120] sm:$0xff] %v361
      %545 = vst [vmem:[#allocation4 + $0x128] sm:$0xff] %v363
      %546 = vst [vmem:[#allocation4 + $0x130] sm:$0xff] %v474
      %547 = vst [vmem:[#allocation4 + $0x138] sm:$0xff] %v476
      %548 = vst [vmem:[#allocation4 + $0x140] sm:$0xff] %v367
      %549 = vst [vmem:[#allocation4 + $0x148] sm:$0xff] %v369
      %550 = vst [vmem:[#allocation4 + $0x150] sm:$0xff] %v480
      %551 = vst [vmem:[#allocation4 + $0x158] sm:$0xff] %v482
      %552 = vst [vmem:[#allocation4 + $0x160] sm:$0xff] %v371
      %553 = vst [vmem:[#allocation4 + $0x168] sm:$0xff] %v373
      %554 = vst [vmem:[#allocation4 + $0x170] sm:$0xff] %v484
      %555 = vst [vmem:[#allocation4 + $0x178] sm:$0xff] %v486
      %556 = vst [vmem:[#allocation4 + $0x180] sm:$0xff] %v377
      %557 = vst [vmem:[#allocation4 + $0x188] sm:$0xff] %v379
      %558 = vst [vmem:[#allocation4 + $0x190] sm:$0xff] %v490
      %559 = vst [vmem:[#allocation4 + $0x198] sm:$0xff] %v492
      %560 = vst [vmem:[#allocation4 + $0x1a0] sm:$0xff] %v381
      %561 = vst [vmem:[#allocation4 + $0x1a8] sm:$0xff] %v383
      %562 = vst [vmem:[#allocation4 + $0x1b0] sm:$0xff] %v494
      %563 = vst [vmem:[#allocation4 + $0x1b8] sm:$0xff] %v496
      %564 = vst [vmem:[#allocation4 + $0x1c0] sm:$0xff] %v387
      %565 = vst [vmem:[#allocation4 + $0x1c8] sm:$0xff] %v389
      %566 = vst [vmem:[#allocation4 + $0x1d0] sm:$0xff] %v500
      %567 = vst [vmem:[#allocation4 + $0x1d8] sm:$0xff] %v502
      %568 = vst [vmem:[#allocation4 + $0x1e0] sm:$0xff] %v391
      %569 = vst [vmem:[#allocation4 + $0x1e8] sm:$0xff] %v393
      %570 = vst [vmem:[#allocation4 + $0x1f0] sm:$0xff] %v504
      %571 = vst [vmem:[#allocation4 + $0x1f8] sm:$0xff] %v506
      %v572 = vld [vmem:[#allocation12] sm:$0xff]
      %v573 = vld [vmem:[#allocation12 + $0x8] sm:$0xff]
      %v574 = vld [vmem:[#allocation12 + $0x10] sm:$0xff]
      %v575 = vld [vmem:[#allocation12 + $0x18] sm:$0xff]
      %v576 = vld [vmem:[#allocation12 + $0x20] sm:$0xff]
      %v577 = vld [vmem:[#allocation12 + $0x28] sm:$0xff]
      %v578 = vld [vmem:[#allocation12 + $0x30] sm:$0xff]
      %v579 = vld [vmem:[#allocation12 + $0x38] sm:$0xff]
      %v580 = vld [vmem:[#allocation12 + $0x40] sm:$0xff]
      %v581 = vld [vmem:[#allocation12 + $0x48] sm:$0xff]
      %v582 = vld [vmem:[#allocation12 + $0x50] sm:$0xff]
      %v583 = vld [vmem:[#allocation12 + $0x58] sm:$0xff]
      %v584 = vld [vmem:[#allocation12 + $0x60] sm:$0xff]
      %v585 = vld [vmem:[#allocation12 + $0x68] sm:$0xff]
      %v586 = vld [vmem:[#allocation12 + $0x70] sm:$0xff]
      %v587 = vld [vmem:[#allocation12 + $0x78] sm:$0xff]
      %v588 = vld [vmem:[#allocation12 + $0x80] sm:$0xff]
      %v589 = vld [vmem:[#allocation12 + $0x88] sm:$0xff]
      %v590 = vld [vmem:[#allocation12 + $0x90] sm:$0xff]
      %v591 = vld [vmem:[#allocation12 + $0x98] sm:$0xff]
      %v592 = vld [vmem:[#allocation12 + $0xa0] sm:$0xff]
      %v593 = vld [vmem:[#allocation12 + $0xa8] sm:$0xff]
      %v594 = vld [vmem:[#allocation12 + $0xb0] sm:$0xff]
      %v595 = vld [vmem:[#allocation12 + $0xb8] sm:$0xff]
      %v596 = vld [vmem:[#allocation12 + $0xc0] sm:$0xff]
      %v597 = vld [vmem:[#allocation12 + $0xc8] sm:$0xff]
      %v598 = vld [vmem:[#allocation12 + $0xd0] sm:$0xff]
      %v599 = vld [vmem:[#allocation12 + $0xd8] sm:$0xff]
      %v600 = vld [vmem:[#allocation12 + $0xe0] sm:$0xff]
      %v601 = vld [vmem:[#allocation12 + $0xe8] sm:$0xff]
      %v602 = vld [vmem:[#allocation12 + $0xf0] sm:$0xff]
      %v603 = vld [vmem:[#allocation12 + $0xf8] sm:$0xff]
      %v604 = vld [vmem:[%s1] sm:$0xff]
      %v605 = vld [vmem:[%s1 + $0x8] sm:$0xff]
      %606 = vset.pattern.permute.xlu0 0
      %607 = vperm.xlu0 %606, %v604
      %v608 = vpop.permute.xlu0 %607
      %609 = vset.pattern.permute.xlu0 0
      %610 = vperm.xlu0 %609, %v605
      %v611 = vpop.permute.xlu0 %610
      %v612 = vld [vmem:[#allocation2] sm:$0xff]
      %v613 = vld [vmem:[#allocation3] sm:$0xff]
      %v614 = vld [vmem:[#allocation3 + $0x8] sm:$0xff]
      %s615 = smul.u32 0, 4
      %s616 = smul.addr %s615, 8
      %s617 = scalar_lea.vmem [#allocation4], %s616
      %v618 = vld [vmem:[%s617] sm:$0xff]
      %v619 = vld [vmem:[%s617 + $0x8] sm:$0xff]
      %v620 = vld [vmem:[%s617 + $0x10] sm:$0xff]
      %v621 = vld [vmem:[%s617 + $0x18] sm:$0xff]
      %v622 = vld [vmem:[%s617 + $0x20] sm:$0xff]
      %v623 = vld [vmem:[%s617 + $0x28] sm:$0xff]
      %v624 = vld [vmem:[%s617 + $0x30] sm:$0xff]
      %v625 = vld [vmem:[%s617 + $0x38] sm:$0xff]
      %v658 = vunpack.c.l.b16 %v572
      %v659 = vunpack.c.h.b16 %v572
      %v660 = vunpack.c.l.b16 %v573
      %v661 = vunpack.c.h.b16 %v573
      %v662 = vunpack.c.l.b16 %v574
      %v663 = vunpack.c.h.b16 %v574
      %v664 = vunpack.c.l.b16 %v575
      %v665 = vunpack.c.h.b16 %v575
      %v666 = vunpack.c.l.b16 %v576
      %v667 = vunpack.c.h.b16 %v576
      %v668 = vunpack.c.l.b16 %v577
      %v669 = vunpack.c.h.b16 %v577
      %v670 = vunpack.c.l.b16 %v578
      %v671 = vunpack.c.h.b16 %v578
      %v672 = vunpack.c.l.b16 %v579
      %v673 = vunpack.c.h.b16 %v579
      %v674 = vunpack.c.l.b16 %v580
      %v675 = vunpack.c.h.b16 %v580
      %v676 = vunpack.c.l.b16 %v581
      %v677 = vunpack.c.h.b16 %v581
      %v678 = vunpack.c.l.b16 %v582
      %v679 = vunpack.c.h.b16 %v582
      %v680 = vunpack.c.l.b16 %v583
      %v681 = vunpack.c.h.b16 %v583
      %v682 = vunpack.c.l.b16 %v584
      %v683 = vunpack.c.h.b16 %v584
      %v684 = vunpack.c.l.b16 %v585
      %v685 = vunpack.c.h.b16 %v585
      %v686 = vunpack.c.l.b16 %v586
      %v687 = vunpack.c.h.b16 %v586
      %v688 = vunpack.c.l.b16 %v587
      %v689 = vunpack.c.h.b16 %v587
      %v690 = vunpack.c.l.b16 %v588
      %v691 = vunpack.c.h.b16 %v588
      %v692 = vunpack.c.l.b16 %v589
      %v693 = vunpack.c.h.b16 %v589
      %v694 = vunpack.c.l.b16 %v590
      %v695 = vunpack.c.h.b16 %v590
      %v696 = vunpack.c.l.b16 %v591
      %v697 = vunpack.c.h.b16 %v591
      %v698 = vunpack.c.l.b16 %v592
      %v699 = vunpack.c.h.b16 %v592
      %v700 = vunpack.c.l.b16 %v593
      %v701 = vunpack.c.h.b16 %v593
      %v702 = vunpack.c.l.b16 %v594
      %v703 = vunpack.c.h.b16 %v594
      %v704 = vunpack.c.l.b16 %v595
      %v705 = vunpack.c.h.b16 %v595
      %v706 = vunpack.c.l.b16 %v596
      %v707 = vunpack.c.h.b16 %v596
      %v708 = vunpack.c.l.b16 %v597
      %v709 = vunpack.c.h.b16 %v597
      %v710 = vunpack.c.l.b16 %v598
      %v711 = vunpack.c.h.b16 %v598
      %v712 = vunpack.c.l.b16 %v599
      %v713 = vunpack.c.h.b16 %v599
      %v714 = vunpack.c.l.b16 %v600
      %v715 = vunpack.c.h.b16 %v600
      %v716 = vunpack.c.l.b16 %v601
      %v717 = vunpack.c.h.b16 %v601
      %v718 = vunpack.c.l.b16 %v602
      %v719 = vunpack.c.h.b16 %v602
      %v720 = vunpack.c.l.b16 %v603
      %v721 = vunpack.c.h.b16 %v603
      %v722 = vpack.c.b16 %v662, %v658
      %v723 = vpack.c.b16 %v663, %v659
      %v724 = vpack.c.b16 %v664, %v660
      %v725 = vpack.c.b16 %v665, %v661
      %v726 = vpack.c.b16 %v670, %v666
      %v727 = vpack.c.b16 %v671, %v667
      %v728 = vpack.c.b16 %v672, %v668
      %v729 = vpack.c.b16 %v673, %v669
      %v730 = vpack.c.b16 %v678, %v674
      %v731 = vpack.c.b16 %v679, %v675
      %v732 = vpack.c.b16 %v680, %v676
      %v733 = vpack.c.b16 %v681, %v677
      %v734 = vpack.c.b16 %v686, %v682
      %v735 = vpack.c.b16 %v687, %v683
      %v736 = vpack.c.b16 %v688, %v684
      %v737 = vpack.c.b16 %v689, %v685
      %v738 = vpack.c.b16 %v694, %v690
      %v739 = vpack.c.b16 %v695, %v691
      %v740 = vpack.c.b16 %v696, %v692
      %v741 = vpack.c.b16 %v697, %v693
      %v742 = vpack.c.b16 %v702, %v698
      %v743 = vpack.c.b16 %v703, %v699
      %v744 = vpack.c.b16 %v704, %v700
      %v745 = vpack.c.b16 %v705, %v701
      %v746 = vpack.c.b16 %v710, %v706
      %v747 = vpack.c.b16 %v711, %v707
      %v748 = vpack.c.b16 %v712, %v708
      %v749 = vpack.c.b16 %v713, %v709
      %v750 = vpack.c.b16 %v718, %v714
      %v751 = vpack.c.b16 %v719, %v715
      %v752 = vpack.c.b16 %v720, %v716
      %v753 = vpack.c.b16 %v721, %v717
      %786 = vmatprep.subr.bf16.mxu0 %v723
      %787 = vmatpush1.bf16.msra.mxu0 %v722
      %788 = vmatprep.subr.bf16.mxu0 %v727
      %789 = vmatpush1.bf16.msra.mxu0 %v726
      %790 = vmatprep.subr.bf16.mxu0 %v731
      %791 = vmatpush1.bf16.msra.mxu0 %v730
      %792 = vmatprep.subr.bf16.mxu0 %v735
      %793 = vmatpush1.bf16.msra.mxu0 %v734
      %794 = vmatprep.subr.bf16.mxu0 %v739
      %795 = vmatpush1.bf16.msra.mxu0 %v738
      %796 = vmatprep.subr.bf16.mxu0 %v743
      %797 = vmatpush1.bf16.msra.mxu0 %v742
      %798 = vmatprep.subr.bf16.mxu0 %v747
      %799 = vmatpush1.bf16.msra.mxu0 %v746
      %800 = vmatprep.subr.bf16.mxu0 %v751
      %801 = vmatpush1.bf16.msra.mxu0 %v750
      %802 = vmatprep.subr.bf16.mxu0 0
      %803 = vmatpush1.bf16.msra.mxu0 0
      %804 = vmatprep.subr.bf16.mxu0 0
      %805 = vmatpush1.bf16.msra.mxu0 0
      %806 = vmatprep.subr.bf16.mxu0 0
      %807 = vmatpush1.bf16.msra.mxu0 0
      %808 = vmatprep.subr.bf16.mxu0 0
      %809 = vmatpush1.bf16.msra.mxu0 0
      %810 = vmatprep.subr.bf16.mxu0 0
      %811 = vmatpush1.bf16.msra.mxu0 0
      %812 = vmatprep.subr.bf16.mxu0 0
      %813 = vmatpush1.bf16.msra.mxu0 0
      %814 = vmatprep.subr.bf16.mxu0 0
      %815 = vmatpush1.bf16.msra.mxu0 0
      %816 = vmatprep.subr.bf16.mxu0 0
      %817 = vmatpush1.bf16.msra.mxu0 0
      %818 = vmatprep.mubr.bf16.mxu0 0
      %819 = vmatmul.mubr.bf16.gmra.mrb[0].mxu0 %v612
      %v820 = vpop.f32.mrb[0].mxu0
      %v821 = vadd.f32 0.0, %v820
      %v822 = vpop.f32.mrb[0].mxu0
      %v823 = vadd.f32 0.0, %v822
      %v824 = vpop.f32.mrb[0].mxu0
      %v825 = vadd.f32 0.0, %v824
      %v826 = vpop.f32.mrb[0].mxu0
      %v827 = vadd.f32 0.0, %v826
      %828 = vdwg.mxu0
      %829 = vmatprep.subr.bf16.mxu0 %v725
      %830 = vmatpush1.bf16.msra.mxu0 %v724
      %831 = vmatprep.subr.bf16.mxu0 %v729
      %832 = vmatpush1.bf16.msra.mxu0 %v728
      %833 = vmatprep.subr.bf16.mxu0 %v733
      %834 = vmatpush1.bf16.msra.mxu0 %v732
      %835 = vmatprep.subr.bf16.mxu0 %v737
      %836 = vmatpush1.bf16.msra.mxu0 %v736
      %837 = vmatprep.subr.bf16.mxu0 %v741
      %838 = vmatpush1.bf16.msra.mxu0 %v740
      %839 = vmatprep.subr.bf16.mxu0 %v745
      %840 = vmatpush1.bf16.msra.mxu0 %v744
      %841 = vmatprep.subr.bf16.mxu0 %v749
      %842 = vmatpush1.bf16.msra.mxu0 %v748
      %843 = vmatprep.subr.bf16.mxu0 %v753
      %844 = vmatpush1.bf16.msra.mxu0 %v752
      %845 = vmatprep.subr.bf16.mxu0 0
      %846 = vmatpush1.bf16.msra.mxu0 0
      %847 = vmatprep.subr.bf16.mxu0 0
      %848 = vmatpush1.bf16.msra.mxu0 0
      %849 = vmatprep.subr.bf16.mxu0 0
      %850 = vmatpush1.bf16.msra.mxu0 0
      %851 = vmatprep.subr.bf16.mxu0 0
      %852 = vmatpush1.bf16.msra.mxu0 0
      %853 = vmatprep.subr.bf16.mxu0 0
      %854 = vmatpush1.bf16.msra.mxu0 0
      %855 = vmatprep.subr.bf16.mxu0 0
      %856 = vmatpush1.bf16.msra.mxu0 0
      %857 = vmatprep.subr.bf16.mxu0 0
      %858 = vmatpush1.bf16.msra.mxu0 0
      %859 = vmatprep.subr.bf16.mxu0 0
      %860 = vmatpush1.bf16.msra.mxu0 0
      %861 = vmatprep.mubr.bf16.mxu0 0
      %862 = vmatmul.mubr.bf16.gmra.mrb[0].mxu0 %v612
      %v863 = vpop.f32.mrb[0].mxu0
      %v864 = vadd.f32 0.0, %v863
      %v865 = vpop.f32.mrb[0].mxu0
      %v866 = vadd.f32 0.0, %v865
      %v867 = vpop.f32.mrb[0].mxu0
      %v868 = vadd.f32 0.0, %v867
      %v869 = vpop.f32.mrb[0].mxu0
      %v870 = vadd.f32 0.0, %v869
      %871 = vdwg.mxu0
      %v872 = vadd.f32 %v618, %v821
      %v873 = vadd.f32 %v619, %v823
      %v874 = vadd.f32 %v620, %v864
      %v875 = vadd.f32 %v621, %v866
      %v876 = vadd.f32 %v622, %v825
      %v877 = vadd.f32 %v623, %v827
      %v878 = vadd.f32 %v624, %v868
      %v879 = vadd.f32 %v625, %v870
      %v880 = vxor.u32 %v872, 2147483648
      %v881 = vxor.u32 %v876, 2147483648
      %v882 = vmul.f32 %v880, 1.442695
      %v883 = vpow.pop %v882
      %v884 = vmul.f32 %v881, 1.442695
      %v885 = vpow.pop %v884
      %v886 = vadd.f32 %v883, 1.0
      %v887 = vadd.f32 %v885, 1.0
      %v888 = vrcp.pop %v886
      %v889 = vmul.f32 1.0, %v888
      %v890 = vrcp.pop %v887
      %v891 = vmul.f32 1.0, %v890
      %v892 = vxor.u32 %v873, 2147483648
      %v893 = vxor.u32 %v877, 2147483648
      %v894 = vmul.f32 %v892, 1.442695
      %v895 = vpow.pop %v894
      %v896 = vmul.f32 %v893, 1.442695
      %v897 = vpow.pop %v896
      %v898 = vadd.f32 %v895, 1.0
      %v899 = vadd.f32 %v897, 1.0
      %v900 = vrcp.pop %v898
      %v901 = vmul.f32 1.0, %v900
      %v902 = vrcp.pop %v899
      %v903 = vmul.f32 1.0, %v902
      %v904 = vtanh.pop %v874
      %v905 = vtanh.pop %v878
      %v906 = vxor.u32 %v875, 2147483648
      %v907 = vxor.u32 %v879, 2147483648
      %v908 = vmul.f32 %v906, 1.442695
      %v909 = vpow.pop %v908
      %v910 = vmul.f32 %v907, 1.442695
      %v911 = vpow.pop %v910
      %v912 = vadd.f32 %v909, 1.0
      %v913 = vadd.f32 %v911, 1.0
      %v914 = vrcp.pop %v912
      %v915 = vmul.f32 1.0, %v914
      %v916 = vrcp.pop %v913
      %v917 = vmul.f32 1.0, %v916
      %v918 = vmul.f32 %v901, %v613
      %v919 = vmul.f32 %v903, %v614
      %v920 = vmul.f32 %v889, %v904
      %v921 = vmul.f32 %v891, %v905
      %v922 = vadd.f32 %v918, %v920
      %v923 = vadd.f32 %v919, %v921
      %v924 = vtanh.pop %v922
      %v925 = vtanh.pop %v923
      %v926 = vmul.f32 %v915, %v924
      %v927 = vmul.f32 %v917, %v925
      %v928 = vstv %s125
      %vm929 = vcmp.lt.s32.totalorder %v928, %v608
      %vm930 = vcmp.lt.s32.totalorder %v928, %v611
      %v931 = vpack.c.bf16 %v927, %v926
      %vm932 = vmpackc.low %vm929, %vm929
      %vm933 = vmpackc.low %vm930, %vm930
      %v934 = vsel %vm932, 65537, 0
      %v935 = vsel %vm933, 65537, 0
      %v936 = vunpack.c.l.b16 %v934
      %v937 = vunpack.c.l.b16 %v935
      %v938 = vpack.c.b16 %v937, %v936
      %vm939 = vcmp.ne.s16.totalorder %v938, 0
      %v940 = vsel %vm939, %v931, %v612
      %v941 = vsel %vm929, %v922, %v613
      %v942 = vsel %vm930, %v923, %v614
      %s943 = smul.u32 2, 4
      %s944 = smul.addr %s943, 8
      %s945 = scalar_lea.vmem [#allocation4], %s944
      %v946 = vld [vmem:[%s945] sm:$0xff]
      %v947 = vld [vmem:[%s945 + $0x8] sm:$0xff]
      %v948 = vld [vmem:[%s945 + $0x10] sm:$0xff]
      %v949 = vld [vmem:[%s945 + $0x18] sm:$0xff]
      %v950 = vld [vmem:[%s945 + $0x20] sm:$0xff]
      %v951 = vld [vmem:[%s945 + $0x28] sm:$0xff]
      %v952 = vld [vmem:[%s945 + $0x30] sm:$0xff]
      %v953 = vld [vmem:[%s945 + $0x38] sm:$0xff]
      %954 = vmatprep.subr.bf16.mxu0 %v723
      %955 = vmatpush1.bf16.msra.mxu0 %v722
      %956 = vmatprep.subr.bf16.mxu0 %v727
      %957 = vmatpush1.bf16.msra.mxu0 %v726
      %958 = vmatprep.subr.bf16.mxu0 %v731
      %959 = vmatpush1.bf16.msra.mxu0 %v730
      %960 = vmatprep.subr.bf16.mxu0 %v735
      %961 = vmatpush1.bf16.msra.mxu0 %v734
      %962 = vmatprep.subr.bf16.mxu0 %v739
      %963 = vmatpush1.bf16.msra.mxu0 %v738
      %964 = vmatprep.subr.bf16.mxu0 %v743
      %965 = vmatpush1.bf16.msra.mxu0 %v742
      %966 = vmatprep.subr.bf16.mxu0 %v747
      %967 = vmatpush1.bf16.msra.mxu0 %v746
      %968 = vmatprep.subr.bf16.mxu0 %v751
      %969 = vmatpush1.bf16.msra.mxu0 %v750
      %970 = vmatprep.subr.bf16.mxu0 0
      %971 = vmatpush1.bf16.msra.mxu0 0
      %972 = vmatprep.subr.bf16.mxu0 0
      %973 = vmatpush1.bf16.msra.mxu0 0
      %974 = vmatprep.subr.bf16.mxu0 0
      %975 = vmatpush1.bf16.msra.mxu0 0
      %976 = vmatprep.subr.bf16.mxu0 0
      %977 = vmatpush1.bf16.msra.mxu0 0
      %978 = vmatprep.subr.bf16.mxu0 0
      %979 = vmatpush1.bf16.msra.mxu0 0
      %980 = vmatprep.subr.bf16.mxu0 0
      %981 = vmatpush1.bf16.msra.mxu0 0
      %982 = vmatprep.subr.bf16.mxu0 0
      %983 = vmatpush1.bf16.msra.mxu0 0
      %984 = vmatprep.subr.bf16.mxu0 0
      %985 = vmatpush1.bf16.msra.mxu0 0
      %986 = vmatprep.mubr.bf16.mxu0 0
      %987 = vmatmul.mubr.bf16.gmra.mrb[0].mxu0 %v940
      %v988 = vpop.f32.mrb[0].mxu0
      %v989 = vadd.f32 0.0, %v988
      %v990 = vpop.f32.mrb[0].mxu0
      %v991 = vadd.f32 0.0, %v990
      %v992 = vpop.f32.mrb[0].mxu0
      %v993 = vadd.f32 0.0, %v992
      %v994 = vpop.f32.mrb[0].mxu0
      %v995 = vadd.f32 0.0, %v994
      %996 = vdwg.mxu0
      %997 = vmatprep.subr.bf16.mxu0 %v725
      %998 = vmatpush1.bf16.msra.mxu0 %v724
      %999 = vmatprep.subr.bf16.mxu0 %v729
      %1000 = vmatpush1.bf16.msra.mxu0 %v728
      %1001 = vmatprep.subr.bf16.mxu0 %v733
      %1002 = vmatpush1.bf16.msra.mxu0 %v732
      %1003 = vmatprep.subr.bf16.mxu0 %v737
      %1004 = vmatpush1.bf16.msra.mxu0 %v736
      %1005 = vmatprep.subr.bf16.mxu0 %v741
      %1006 = vmatpush1.bf16.msra.mxu0 %v740
      %1007 = vmatprep.subr.bf16.mxu0 %v745
      %1008 = vmatpush1.bf16.msra.mxu0 %v744
      %1009 = vmatprep.subr.bf16.mxu0 %v749
      %1010 = vmatpush1.bf16.msra.mxu0 %v748
      %1011 = vmatprep.subr.bf16.mxu0 %v753
      %1012 = vmatpush1.bf16.msra.mxu0 %v752
      %1013 = vmatprep.subr.bf16.mxu0 0
      %1014 = vmatpush1.bf16.msra.mxu0 0
      %1015 = vmatprep.subr.bf16.mxu0 0
      %1016 = vmatpush1.bf16.msra.mxu0 0
      %1017 = vmatprep.subr.bf16.mxu0 0
      %1018 = vmatpush1.bf16.msra.mxu0 0
      %1019 = vmatprep.subr.bf16.mxu0 0
      %1020 = vmatpush1.bf16.msra.mxu0 0
      %1021 = vmatprep.subr.bf16.mxu0 0
      %1022 = vmatpush1.bf16.msra.mxu0 0
      %1023 = vmatprep.subr.bf16.mxu0 0
      %1024 = vmatpush1.bf16.msra.mxu0 0
      %1025 = vmatprep.subr.bf16.mxu0 0
      %1026 = vmatpush1.bf16.msra.mxu0 0
      %1027 = vmatprep.subr.bf16.mxu0 0
      %1028 = vmatpush1.bf16.msra.mxu0 0
      %1029 = vmatprep.mubr.bf16.mxu0 0
      %1030 = vmatmul.mubr.bf16.gmra.mrb[0].mxu0 %v940
      %v1031 = vpop.f32.mrb[0].mxu0
      %v1032 = vadd.f32 0.0, %v1031
      %v1033 = vpop.f32.mrb[0].mxu0
      %v1034 = vadd.f32 0.0, %v1033
      %v1035 = vpop.f32.mrb[0].mxu0
      %v1036 = vadd.f32 0.0, %v1035
      %v1037 = vpop.f32.mrb[0].mxu0
      %v1038 = vadd.f32 0.0, %v1037
      %1039 = vdwg.mxu0
      %v1040 = vadd.f32 %v946, %v989
      %v1041 = vadd.f32 %v947, %v991
      %v1042 = vadd.f32 %v948, %v1032
      %v1043 = vadd.f32 %v949, %v1034
      %v1044 = vadd.f32 %v950, %v993
      %v1045 = vadd.f32 %v951, %v995
      %v1046 = vadd.f32 %v952, %v1036
      %v1047 = vadd.f32 %v953, %v1038
      %v1048 = vxor.u32 %v1040, 2147483648
      %v1049 = vxor.u32 %v1044, 2147483648
      %v1050 = vmul.f32 %v1048, 1.442695
      %v1051 = vpow.pop %v1050
      %v1052 = vmul.f32 %v1049, 1.442695
      %v1053 = vpow.pop %v1052
      %v1054 = vadd.f32 %v1051, 1.0
      %v1055 = vadd.f32 %v1053, 1.0
      %v1056 = vrcp.pop %v1054
      %v1057 = vmul.f32 1.0, %v1056
      %v1058 = vrcp.pop %v1055
      %v1059 = vmul.f32 1.0, %v1058
      %v1060 = vxor.u32 %v1041, 2147483648
      %v1061 = vxor.u32 %v1045, 2147483648
      %v1062 = vmul.f32 %v1060, 1.442695
      %v1063 = vpow.pop %v1062
      %v1064 = vmul.f32 %v1061, 1.442695
      %v1065 = vpow.pop %v1064
      %v1066 = vadd.f32 %v1063, 1.0
      %v1067 = vadd.f32 %v1065, 1.0
      %v1068 = vrcp.pop %v1066
      %v1069 = vmul.f32 1.0, %v1068
      %v1070 = vrcp.pop %v1067
      %v1071 = vmul.f32 1.0, %v1070
      %v1072 = vtanh.pop %v1042
      %v1073 = vtanh.pop %v1046
      %v1074 = vxor.u32 %v1043, 2147483648
      %v1075 = vxor.u32 %v1047, 2147483648
      %v1076 = vmul.f32 %v1074, 1.442695
      %v1077 = vpow.pop %v1076
      %v1078 = vmul.f32 %v1075, 1.442695
      %v1079 = vpow.pop %v1078
      %v1080 = vadd.f32 %v1077, 1.0
      %v1081 = vadd.f32 %v1079, 1.0
      %v1082 = vrcp.pop %v1080
      %v1083 = vmul.f32 1.0, %v1082
      %v1084 = vrcp.pop %v1081
      %v1085 = vmul.f32 1.0, %v1084
      %v1086 = vmul.f32 %v1069, %v941
      %v1087 = vmul.f32 %v1071, %v942
      %v1088 = vmul.f32 %v1057, %v1072
      %v1089 = vmul.f32 %v1059, %v1073
      %v1090 = vadd.f32 %v1086, %v1088
      %v1091 = vadd.f32 %v1087, %v1089
      %v1092 = vtanh.pop %v1090
      %v1093 = vtanh.pop %v1091
      %v1094 = vmul.f32 %v1083, %v1092
      %v1095 = vmul.f32 %v1085, %v1093
      %s1096 = sadd.s32 %s125, 1
      %v1097 = vstv %s1096
      %vm1098 = vcmp.lt.s32.totalorder %v1097, %v608
      %vm1099 = vcmp.lt.s32.totalorder %v1097, %v611
      %v1100 = vpack.c.bf16 %v1095, %v1094
      %vm1101 = vmpackc.low %vm1098, %vm1098
      %vm1102 = vmpackc.low %vm1099, %vm1099
      %v1103 = vsel %vm1101, 65537, 0
      %v1104 = vsel %vm1102, 65537, 0
      %v1105 = vunpack.c.l.b16 %v1103
      %v1106 = vunpack.c.l.b16 %v1104
      %v1107 = vpack.c.b16 %v1106, %v1105
      %vm1108 = vcmp.ne.s16.totalorder %v1107, 0
      %v1109 = vsel %vm1108, %v1100, %v940
      %v1110 = vsel %vm1098, %v1090, %v941
      %v1111 = vsel %vm1099, %v1091, %v942
      %s1112 = smul.u32 4, 4
      %s1113 = smul.addr %s1112, 8
      %s1114 = scalar_lea.vmem [#allocation4], %s1113
      %v1115 = vld [vmem:[%s1114] sm:$0xff]
      %v1116 = vld [vmem:[%s1114 + $0x8] sm:$0xff]
      %v1117 = vld [vmem:[%s1114 + $0x10] sm:$0xff]
      %v1118 = vld [vmem:[%s1114 + $0x18] sm:$0xff]
      %v1119 = vld [vmem:[%s1114 + $0x20] sm:$0xff]
      %v1120 = vld [vmem:[%s1114 + $0x28] sm:$0xff]
      %v1121 = vld [vmem:[%s1114 + $0x30] sm:$0xff]
      %v1122 = vld [vmem:[%s1114 + $0x38] sm:$0xff]
      %1123 = vmatprep.subr.bf16.mxu0 %v723
      %1124 = vmatpush1.bf16.msra.mxu0 %v722
      %1125 = vmatprep.subr.bf16.mxu0 %v727
      %1126 = vmatpush1.bf16.msra.mxu0 %v726
      %1127 = vmatprep.subr.bf16.mxu0 %v731
      %1128 = vmatpush1.bf16.msra.mxu0 %v730
      %1129 = vmatprep.subr.bf16.mxu0 %v735
      %1130 = vmatpush1.bf16.msra.mxu0 %v734
      %1131 = vmatprep.subr.bf16.mxu0 %v739
      %1132 = vmatpush1.bf16.msra.mxu0 %v738
      %1133 = vmatprep.subr.bf16.mxu0 %v743
      %1134 = vmatpush1.bf16.msra.mxu0 %v742
      %1135 = vmatprep.subr.bf16.mxu0 %v747
      %1136 = vmatpush1.bf16.msra.mxu0 %v746
      %1137 = vmatprep.subr.bf16.mxu0 %v751
      %1138 = vmatpush1.bf16.msra.mxu0 %v750
      %1139 = vmatprep.subr.bf16.mxu0 0
      %1140 = vmatpush1.bf16.msra.mxu0 0
      %1141 = vmatprep.subr.bf16.mxu0 0
      %1142 = vmatpush1.bf16.msra.mxu0 0
      %1143 = vmatprep.subr.bf16.mxu0 0
      %1144 = vmatpush1.bf16.msra.mxu0 0
      %1145 = vmatprep.subr.bf16.mxu0 0
      %1146 = vmatpush1.bf16.msra.mxu0 0
      %1147 = vmatprep.subr.bf16.mxu0 0
      %1148 = vmatpush1.bf16.msra.mxu0 0
      %1149 = vmatprep.subr.bf16.mxu0 0
      %1150 = vmatpush1.bf16.msra.mxu0 0
      %1151 = vmatprep.subr.bf16.mxu0 0
      %1152 = vmatpush1.bf16.msra.mxu0 0
      %1153 = vmatprep.subr.bf16.mxu0 0
      %1154 = vmatpush1.bf16.msra.mxu0 0
      %1155 = vmatprep.mubr.bf16.mxu0 0
      %1156 = vmatmul.mubr.bf16.gmra.mrb[0].mxu0 %v1109
      %v1157 = vpop.f32.mrb[0].mxu0
      %v1158 = vadd.f32 0.0, %v1157
      %v1159 = vpop.f32.mrb[0].mxu0
      %v1160 = vadd.f32 0.0, %v1159
      %v1161 = vpop.f32.mrb[0].mxu0
      %v1162 = vadd.f32 0.0, %v1161
      %v1163 = vpop.f32.mrb[0].mxu0
      %v1164 = vadd.f32 0.0, %v1163
      %1165 = vdwg.mxu0
      %1166 = vmatprep.subr.bf16.mxu0 %v725
      %1167 = vmatpush1.bf16.msra.mxu0 %v724
      %1168 = vmatprep.subr.bf16.mxu0 %v729
      %1169 = vmatpush1.bf16.msra.mxu0 %v728
      %1170 = vmatprep.subr.bf16.mxu0 %v733
      %1171 = vmatpush1.bf16.msra.mxu0 %v732
      %1172 = vmatprep.subr.bf16.mxu0 %v737
      %1173 = vmatpush1.bf16.msra.mxu0 %v736
      %1174 = vmatprep.subr.bf16.mxu0 %v741
      %1175 = vmatpush1.bf16.msra.mxu0 %v740
      %1176 = vmatprep.subr.bf16.mxu0 %v745
      %1177 = vmatpush1.bf16.msra.mxu0 %v744
      %1178 = vmatprep.subr.bf16.mxu0 %v749
      %1179 = vmatpush1.bf16.msra.mxu0 %v748
      %1180 = vmatprep.subr.bf16.mxu0 %v753
      %1181 = vmatpush1.bf16.msra.mxu0 %v752
      %1182 = vmatprep.subr.bf16.mxu0 0
      %1183 = vmatpush1.bf16.msra.mxu0 0
      %1184 = vmatprep.subr.bf16.mxu0 0
      %1185 = vmatpush1.bf16.msra.mxu0 0
      %1186 = vmatprep.subr.bf16.mxu0 0
      %1187 = vmatpush1.bf16.msra.mxu0 0
      %1188 = vmatprep.subr.bf16.mxu0 0
      %1189 = vmatpush1.bf16.msra.mxu0 0
      %1190 = vmatprep.subr.bf16.mxu0 0
      %1191 = vmatpush1.bf16.msra.mxu0 0
      %1192 = vmatprep.subr.bf16.mxu0 0
      %1193 = vmatpush1.bf16.msra.mxu0 0
      %1194 = vmatprep.subr.bf16.mxu0 0
      %1195 = vmatpush1.bf16.msra.mxu0 0
      %1196 = vmatprep.subr.bf16.mxu0 0
      %1197 = vmatpush1.bf16.msra.mxu0 0
      %1198 = vmatprep.mubr.bf16.mxu0 0
      %1199 = vmatmul.mubr.bf16.gmra.mrb[0].mxu0 %v1109
      %v1200 = vpop.f32.mrb[0].mxu0
      %v1201 = vadd.f32 0.0, %v1200
      %v1202 = vpop.f32.mrb[0].mxu0
      %v1203 = vadd.f32 0.0, %v1202
      %v1204 = vpop.f32.mrb[0].mxu0
      %v1205 = vadd.f32 0.0, %v1204
      %v1206 = vpop.f32.mrb[0].mxu0
      %v1207 = vadd.f32 0.0, %v1206
      %1208 = vdwg.mxu0
      %v1209 = vadd.f32 %v1115, %v1158
      %v1210 = vadd.f32 %v1116, %v1160
      %v1211 = vadd.f32 %v1117, %v1201
      %v1212 = vadd.f32 %v1118, %v1203
      %v1213 = vadd.f32 %v1119, %v1162
      %v1214 = vadd.f32 %v1120, %v1164
      %v1215 = vadd.f32 %v1121, %v1205
      %v1216 = vadd.f32 %v1122, %v1207
      %v1217 = vxor.u32 %v1209, 2147483648
      %v1218 = vxor.u32 %v1213, 2147483648
      %v1219 = vmul.f32 %v1217, 1.442695
      %v1220 = vpow.pop %v1219
      %v1221 = vmul.f32 %v1218, 1.442695
      %v1222 = vpow.pop %v1221
      %v1223 = vadd.f32 %v1220, 1.0
      %v1224 = vadd.f32 %v1222, 1.0
      %v1225 = vrcp.pop %v1223
      %v1226 = vmul.f32 1.0, %v1225
      %v1227 = vrcp.pop %v1224
      %v1228 = vmul.f32 1.0, %v1227
      %v1229 = vxor.u32 %v1210, 2147483648
      %v1230 = vxor.u32 %v1214, 2147483648
      %v1231 = vmul.f32 %v1229, 1.442695
      %v1232 = vpow.pop %v1231
      %v1233 = vmul.f32 %v1230, 1.442695
      %v1234 = vpow.pop %v1233
      %v1235 = vadd.f32 %v1232, 1.0
      %v1236 = vadd.f32 %v1234, 1.0
      %v1237 = vrcp.pop %v1235
      %v1238 = vmul.f32 1.0, %v1237
      %v1239 = vrcp.pop %v1236
      %v1240 = vmul.f32 1.0, %v1239
      %v1241 = vtanh.pop %v1211
      %v1242 = vtanh.pop %v1215
      %v1243 = vxor.u32 %v1212, 2147483648
      %v1244 = vxor.u32 %v1216, 2147483648
      %v1245 = vmul.f32 %v1243, 1.442695
      %v1246 = vpow.pop %v1245
      %v1247 = vmul.f32 %v1244, 1.442695
      %v1248 = vpow.pop %v1247
      %v1249 = vadd.f32 %v1246, 1.0
      %v1250 = vadd.f32 %v1248, 1.0
      %v1251 = vrcp.pop %v1249
      %v1252 = vmul.f32 1.0, %v1251
      %v1253 = vrcp.pop %v1250
      %v1254 = vmul.f32 1.0, %v1253
      %v1255 = vmul.f32 %v1238, %v1110
      %v1256 = vmul.f32 %v1240, %v1111
      %v1257 = vmul.f32 %v1226, %v1241
      %v1258 = vmul.f32 %v1228, %v1242
      %v1259 = vadd.f32 %v1255, %v1257
      %v1260 = vadd.f32 %v1256, %v1258
      %v1261 = vtanh.pop %v1259
      %v1262 = vtanh.pop %v1260
      %v1263 = vmul.f32 %v1252, %v1261
      %v1264 = vmul.f32 %v1254, %v1262
      %s1265 = sadd.s32 %s125, 2
      %v1266 = vstv %s1265
      %vm1267 = vcmp.lt.s32.totalorder %v1266, %v608
      %vm1268 = vcmp.lt.s32.totalorder %v1266, %v611
      %v1269 = vpack.c.bf16 %v1264, %v1263
      %vm1270 = vmpackc.low %vm1267, %vm1267
      %vm1271 = vmpackc.low %vm1268, %vm1268
      %v1272 = vsel %vm1270, 65537, 0
      %v1273 = vsel %vm1271, 65537, 0
      %v1274 = vunpack.c.l.b16 %v1272
      %v1275 = vunpack.c.l.b16 %v1273
      %v1276 = vpack.c.b16 %v1275, %v1274
      %vm1277 = vcmp.ne.s16.totalorder %v1276, 0
      %v1278 = vsel %vm1277, %v1269, %v1109
      %v1279 = vsel %vm1267, %v1259, %v1110
      %v1280 = vsel %vm1268, %v1260, %v1111
      %s1281 = smul.u32 6, 4
      %s1282 = smul.addr %s1281, 8
      %s1283 = scalar_lea.vmem [#allocation4], %s1282
      %v1284 = vld [vmem:[%s1283] sm:$0xff]
      %v1285 = vld [vmem:[%s1283 + $0x8] sm:$0xff]
      %v1286 = vld [vmem:[%s1283 + $0x10] sm:$0xff]
      %v1287 = vld [vmem:[%s1283 + $0x18] sm:$0xff]
      %v1288 = vld [vmem:[%s1283 + $0x20] sm:$0xff]
      %v1289 = vld [vmem:[%s1283 + $0x28] sm:$0xff]
      %v1290 = vld [vmem:[%s1283 + $0x30] sm:$0xff]
      %v1291 = vld [vmem:[%s1283 + $0x38] sm:$0xff]
      %1292 = vmatprep.subr.bf16.mxu0 %v723
      %1293 = vmatpush1.bf16.msra.mxu0 %v722
      %1294 = vmatprep.subr.bf16.mxu0 %v727
      %1295 = vmatpush1.bf16.msra.mxu0 %v726
      %1296 = vmatprep.subr.bf16.mxu0 %v731
      %1297 = vmatpush1.bf16.msra.mxu0 %v730
      %1298 = vmatprep.subr.bf16.mxu0 %v735
      %1299 = vmatpush1.bf16.msra.mxu0 %v734
      %1300 = vmatprep.subr.bf16.mxu0 %v739
      %1301 = vmatpush1.bf16.msra.mxu0 %v738
      %1302 = vmatprep.subr.bf16.mxu0 %v743
      %1303 = vmatpush1.bf16.msra.mxu0 %v742
      %1304 = vmatprep.subr.bf16.mxu0 %v747
      %1305 = vmatpush1.bf16.msra.mxu0 %v746
      %1306 = vmatprep.subr.bf16.mxu0 %v751
      %1307 = vmatpush1.bf16.msra.mxu0 %v750
      %1308 = vmatprep.subr.bf16.mxu0 0
      %1309 = vmatpush1.bf16.msra.mxu0 0
      %1310 = vmatprep.subr.bf16.mxu0 0
      %1311 = vmatpush1.bf16.msra.mxu0 0
      %1312 = vmatprep.subr.bf16.mxu0 0
      %1313 = vmatpush1.bf16.msra.mxu0 0
      %1314 = vmatprep.subr.bf16.mxu0 0
      %1315 = vmatpush1.bf16.msra.mxu0 0
      %1316 = vmatprep.subr.bf16.mxu0 0
      %1317 = vmatpush1.bf16.msra.mxu0 0
      %1318 = vmatprep.subr.bf16.mxu0 0
      %1319 = vmatpush1.bf16.msra.mxu0 0
      %1320 = vmatprep.subr.bf16.mxu0 0
      %1321 = vmatpush1.bf16.msra.mxu0 0
      %1322 = vmatprep.subr.bf16.mxu0 0
      %1323 = vmatpush1.bf16.msra.mxu0 0
      %1324 = vmatprep.mubr.bf16.mxu0 0
      %1325 = vmatmul.mubr.bf16.gmra.mrb[0].mxu0 %v1278
      %v1326 = vpop.f32.mrb[0].mxu0
      %v1327 = vadd.f32 0.0, %v1326
      %v1328 = vpop.f32.mrb[0].mxu0
      %v1329 = vadd.f32 0.0, %v1328
      %v1330 = vpop.f32.mrb[0].mxu0
      %v1331 = vadd.f32 0.0, %v1330
      %v1332 = vpop.f32.mrb[0].mxu0
      %v1333 = vadd.f32 0.0, %v1332
      %1334 = vdwg.mxu0
      %1335 = vmatprep.subr.bf16.mxu0 %v725
      %1336 = vmatpush1.bf16.msra.mxu0 %v724
      %1337 = vmatprep.subr.bf16.mxu0 %v729
      %1338 = vmatpush1.bf16.msra.mxu0 %v728
      %1339 = vmatprep.subr.bf16.mxu0 %v733
      %1340 = vmatpush1.bf16.msra.mxu0 %v732
      %1341 = vmatprep.subr.bf16.mxu0 %v737
      %1342 = vmatpush1.bf16.msra.mxu0 %v736
      %1343 = vmatprep.subr.bf16.mxu0 %v741
      %1344 = vmatpush1.bf16.msra.mxu0 %v740
      %1345 = vmatprep.subr.bf16.mxu0 %v745
      %1346 = vmatpush1.bf16.msra.mxu0 %v744
      %1347 = vmatprep.subr.bf16.mxu0 %v749
      %1348 = vmatpush1.bf16.msra.mxu0 %v748
      %1349 = vmatprep.subr.bf16.mxu0 %v753
      %1350 = vmatpush1.bf16.msra.mxu0 %v752
      %1351 = vmatprep.subr.bf16.mxu0 0
      %1352 = vmatpush1.bf16.msra.mxu0 0
      %1353 = vmatprep.subr.bf16.mxu0 0
      %1354 = vmatpush1.bf16.msra.mxu0 0
      %1355 = vmatprep.subr.bf16.mxu0 0
      %1356 = vmatpush1.bf16.msra.mxu0 0
      %1357 = vmatprep.subr.bf16.mxu0 0
      %1358 = vmatpush1.bf16.msra.mxu0 0
      %1359 = vmatprep.subr.bf16.mxu0 0
      %1360 = vmatpush1.bf16.msra.mxu0 0
      %1361 = vmatprep.subr.bf16.mxu0 0
      %1362 = vmatpush1.bf16.msra.mxu0 0
      %1363 = vmatprep.subr.bf16.mxu0 0
      %1364 = vmatpush1.bf16.msra.mxu0 0
      %1365 = vmatprep.subr.bf16.mxu0 0
      %1366 = vmatpush1.bf16.msra.mxu0 0
      %1367 = vmatprep.mubr.bf16.mxu0 0
      %1368 = vmatmul.mubr.bf16.gmra.mrb[0].mxu0 %v1278
      %v1369 = vpop.f32.mrb[0].mxu0
      %v1370 = vadd.f32 0.0, %v1369
      %v1371 = vpop.f32.mrb[0].mxu0
      %v1372 = vadd.f32 0.0, %v1371
      %v1373 = vpop.f32.mrb[0].mxu0
      %v1374 = vadd.f32 0.0, %v1373
      %v1375 = vpop.f32.mrb[0].mxu0
      %v1376 = vadd.f32 0.0, %v1375
      %1377 = vdwg.mxu0
      %v1378 = vadd.f32 %v1284, %v1327
      %v1379 = vadd.f32 %v1285, %v1329
      %v1380 = vadd.f32 %v1286, %v1370
      %v1381 = vadd.f32 %v1287, %v1372
      %v1382 = vadd.f32 %v1288, %v1331
      %v1383 = vadd.f32 %v1289, %v1333
      %v1384 = vadd.f32 %v1290, %v1374
      %v1385 = vadd.f32 %v1291, %v1376
      %v1386 = vxor.u32 %v1378, 2147483648
      %v1387 = vxor.u32 %v1382, 2147483648
      %v1388 = vmul.f32 %v1386, 1.442695
      %v1389 = vpow.pop %v1388
      %v1390 = vmul.f32 %v1387, 1.442695
      %v1391 = vpow.pop %v1390
      %v1392 = vadd.f32 %v1389, 1.0
      %v1393 = vadd.f32 %v1391, 1.0
      %v1394 = vrcp.pop %v1392
      %v1395 = vmul.f32 1.0, %v1394
      %v1396 = vrcp.pop %v1393
      %v1397 = vmul.f32 1.0, %v1396
      %v1398 = vxor.u32 %v1379, 2147483648
      %v1399 = vxor.u32 %v1383, 2147483648
      %v1400 = vmul.f32 %v1398, 1.442695
      %v1401 = vpow.pop %v1400
      %v1402 = vmul.f32 %v1399, 1.442695
      %v1403 = vpow.pop %v1402
      %v1404 = vadd.f32 %v1401, 1.0
      %v1405 = vadd.f32 %v1403, 1.0
      %v1406 = vrcp.pop %v1404
      %v1407 = vmul.f32 1.0, %v1406
      %v1408 = vrcp.pop %v1405
      %v1409 = vmul.f32 1.0, %v1408
      %v1410 = vtanh.pop %v1380
      %v1411 = vtanh.pop %v1384
      %v1412 = vxor.u32 %v1381, 2147483648
      %v1413 = vxor.u32 %v1385, 2147483648
      %v1414 = vmul.f32 %v1412, 1.442695
      %v1415 = vpow.pop %v1414
      %v1416 = vmul.f32 %v1413, 1.442695
      %v1417 = vpow.pop %v1416
      %v1418 = vadd.f32 %v1415, 1.0
      %v1419 = vadd.f32 %v1417, 1.0
      %v1420 = vrcp.pop %v1418
      %v1421 = vmul.f32 1.0, %v1420
      %v1422 = vrcp.pop %v1419
      %v1423 = vmul.f32 1.0, %v1422
      %v1424 = vmul.f32 %v1407, %v1279
      %v1425 = vmul.f32 %v1409, %v1280
      %v1426 = vmul.f32 %v1395, %v1410
      %v1427 = vmul.f32 %v1397, %v1411
      %v1428 = vadd.f32 %v1424, %v1426
      %v1429 = vadd.f32 %v1425, %v1427
      %v1430 = vtanh.pop %v1428
      %v1431 = vtanh.pop %v1429
      %v1432 = vmul.f32 %v1421, %v1430
      %v1433 = vmul.f32 %v1423, %v1431
      %s1434 = sadd.s32 %s125, 3
      %v1435 = vstv %s1434
      %vm1436 = vcmp.lt.s32.totalorder %v1435, %v608
      %vm1437 = vcmp.lt.s32.totalorder %v1435, %v611
      %v1438 = vpack.c.bf16 %v1433, %v1432
      %vm1439 = vmpackc.low %vm1436, %vm1436
      %vm1440 = vmpackc.low %vm1437, %vm1437
      %v1441 = vsel %vm1439, 65537, 0
      %v1442 = vsel %vm1440, 65537, 0
      %v1443 = vunpack.c.l.b16 %v1441
      %v1444 = vunpack.c.l.b16 %v1442
      %v1445 = vpack.c.b16 %v1444, %v1443
      %vm1446 = vcmp.ne.s16.totalorder %v1445, 0
      %v1447 = vsel %vm1446, %v1438, %v1278
      %v1448 = vsel %vm1436, %v1428, %v1279
      %v1449 = vsel %vm1437, %v1429, %v1280
      %s1450 = smul.u32 8, 4
      %s1451 = smul.addr %s1450, 8
      %s1452 = scalar_lea.vmem [#allocation4], %s1451
      %v1453 = vld [vmem:[%s1452] sm:$0xff]
      %v1454 = vld [vmem:[%s1452 + $0x8] sm:$0xff]
      %v1455 = vld [vmem:[%s1452 + $0x10] sm:$0xff]
      %v1456 = vld [vmem:[%s1452 + $0x18] sm:$0xff]
      %v1457 = vld [vmem:[%s1452 + $0x20] sm:$0xff]
      %v1458 = vld [vmem:[%s1452 + $0x28] sm:$0xff]
      %v1459 = vld [vmem:[%s1452 + $0x30] sm:$0xff]
      %v1460 = vld [vmem:[%s1452 + $0x38] sm:$0xff]
      %1461 = vmatprep.subr.bf16.mxu0 %v723
      %1462 = vmatpush1.bf16.msra.mxu0 %v722
      %1463 = vmatprep.subr.bf16.mxu0 %v727
      %1464 = vmatpush1.bf16.msra.mxu0 %v726
      %1465 = vmatprep.subr.bf16.mxu0 %v731
      %1466 = vmatpush1.bf16.msra.mxu0 %v730
      %1467 = vmatprep.subr.bf16.mxu0 %v735
      %1468 = vmatpush1.bf16.msra.mxu0 %v734
      %1469 = vmatprep.subr.bf16.mxu0 %v739
      %1470 = vmatpush1.bf16.msra.mxu0 %v738
      %1471 = vmatprep.subr.bf16.mxu0 %v743
      %1472 = vmatpush1.bf16.msra.mxu0 %v742
      %1473 = vmatprep.subr.bf16.mxu0 %v747
      %1474 = vmatpush1.bf16.msra.mxu0 %v746
      %1475 = vmatprep.subr.bf16.mxu0 %v751
      %1476 = vmatpush1.bf16.msra.mxu0 %v750
      %1477 = vmatprep.subr.bf16.mxu0 0
      %1478 = vmatpush1.bf16.msra.mxu0 0
      %1479 = vmatprep.subr.bf16.mxu0 0
      %1480 = vmatpush1.bf16.msra.mxu0 0
      %1481 = vmatprep.subr.bf16.mxu0 0
      %1482 = vmatpush1.bf16.msra.mxu0 0
      %1483 = vmatprep.subr.bf16.mxu0 0
      %1484 = vmatpush1.bf16.msra.mxu0 0
      %1485 = vmatprep.subr.bf16.mxu0 0
      %1486 = vmatpush1.bf16.msra.mxu0 0
      %1487 = vmatprep.subr.bf16.mxu0 0
      %1488 = vmatpush1.bf16.msra.mxu0 0
      %1489 = vmatprep.subr.bf16.mxu0 0
      %1490 = vmatpush1.bf16.msra.mxu0 0
      %1491 = vmatprep.subr.bf16.mxu0 0
      %1492 = vmatpush1.bf16.msra.mxu0 0
      %1493 = vmatprep.mubr.bf16.mxu0 0
      %1494 = vmatmul.mubr.bf16.gmra.mrb[0].mxu0 %v1447
      %v1495 = vpop.f32.mrb[0].mxu0
      %v1496 = vadd.f32 0.0, %v1495
      %v1497 = vpop.f32.mrb[0].mxu0
      %v1498 = vadd.f32 0.0, %v1497
      %v1499 = vpop.f32.mrb[0].mxu0
      %v1500 = vadd.f32 0.0, %v1499
      %v1501 = vpop.f32.mrb[0].mxu0
      %v1502 = vadd.f32 0.0, %v1501
      %1503 = vdwg.mxu0
      %1504 = vmatprep.subr.bf16.mxu0 %v725
      %1505 = vmatpush1.bf16.msra.mxu0 %v724
      %1506 = vmatprep.subr.bf16.mxu0 %v729
      %1507 = vmatpush1.bf16.msra.mxu0 %v728
      %1508 = vmatprep.subr.bf16.mxu0 %v733
      %1509 = vmatpush1.bf16.msra.mxu0 %v732
      %1510 = vmatprep.subr.bf16.mxu0 %v737
      %1511 = vmatpush1.bf16.msra.mxu0 %v736
      %1512 = vmatprep.subr.bf16.mxu0 %v741
      %1513 = vmatpush1.bf16.msra.mxu0 %v740
      %1514 = vmatprep.subr.bf16.mxu0 %v745
      %1515 = vmatpush1.bf16.msra.mxu0 %v744
      %1516 = vmatprep.subr.bf16.mxu0 %v749
      %1517 = vmatpush1.bf16.msra.mxu0 %v748
      %1518 = vmatprep.subr.bf16.mxu0 %v753
      %1519 = vmatpush1.bf16.msra.mxu0 %v752
      %1520 = vmatprep.subr.bf16.mxu0 0
      %1521 = vmatpush1.bf16.msra.mxu0 0
      %1522 = vmatprep.subr.bf16.mxu0 0
      %1523 = vmatpush1.bf16.msra.mxu0 0
      %1524 = vmatprep.subr.bf16.mxu0 0
      %1525 = vmatpush1.bf16.msra.mxu0 0
      %1526 = vmatprep.subr.bf16.mxu0 0
      %1527 = vmatpush1.bf16.msra.mxu0 0
      %1528 = vmatprep.subr.bf16.mxu0 0
      %1529 = vmatpush1.bf16.msra.mxu0 0
      %1530 = vmatprep.subr.bf16.mxu0 0
      %1531 = vmatpush1.bf16.msra.mxu0 0
      %1532 = vmatprep.subr.bf16.mxu0 0
      %1533 = vmatpush1.bf16.msra.mxu0 0
      %1534 = vmatprep.subr.bf16.mxu0 0
      %1535 = vmatpush1.bf16.msra.mxu0 0
      %1536 = vmatprep.mubr.bf16.mxu0 0
      %1537 = vmatmul.mubr.bf16.gmra.mrb[0].mxu0 %v1447
      %v1538 = vpop.f32.mrb[0].mxu0
      %v1539 = vadd.f32 0.0, %v1538
      %v1540 = vpop.f32.mrb[0].mxu0
      %v1541 = vadd.f32 0.0, %v1540
      %v1542 = vpop.f32.mrb[0].mxu0
      %v1543 = vadd.f32 0.0, %v1542
      %v1544 = vpop.f32.mrb[0].mxu0
      %v1545 = vadd.f32 0.0, %v1544
      %1546 = vdwg.mxu0
      %v1547 = vadd.f32 %v1453, %v1496
      %v1548 = vadd.f32 %v1454, %v1498
      %v1549 = vadd.f32 %v1455, %v1539
      %v1550 = vadd.f32 %v1456, %v1541
      %v1551 = vadd.f32 %v1457, %v1500
      %v1552 = vadd.f32 %v1458, %v1502
      %v1553 = vadd.f32 %v1459, %v1543
      %v1554 = vadd.f32 %v1460, %v1545
      %v1555 = vxor.u32 %v1547, 2147483648
      %v1556 = vxor.u32 %v1551, 2147483648
      %v1557 = vmul.f32 %v1555, 1.442695
      %v1558 = vpow.pop %v1557
      %v1559 = vmul.f32 %v1556, 1.442695
      %v1560 = vpow.pop %v1559
      %v1561 = vadd.f32 %v1558, 1.0
      %v1562 = vadd.f32 %v1560, 1.0
      %v1563 = vrcp.pop %v1561
      %v1564 = vmul.f32 1.0, %v1563
      %v1565 = vrcp.pop %v1562
      %v1566 = vmul.f32 1.0, %v1565
      %v1567 = vxor.u32 %v1548, 2147483648
      %v1568 = vxor.u32 %v1552, 2147483648
      %v1569 = vmul.f32 %v1567, 1.442695
      %v1570 = vpow.pop %v1569
      %v1571 = vmul.f32 %v1568, 1.442695
      %v1572 = vpow.pop %v1571
      %v1573 = vadd.f32 %v1570, 1.0
      %v1574 = vadd.f32 %v1572, 1.0
      %v1575 = vrcp.pop %v1573
      %v1576 = vmul.f32 1.0, %v1575
      %v1577 = vrcp.pop %v1574
      %v1578 = vmul.f32 1.0, %v1577
      %v1579 = vtanh.pop %v1549
      %v1580 = vtanh.pop %v1553
      %v1581 = vxor.u32 %v1550, 2147483648
      %v1582 = vxor.u32 %v1554, 2147483648
      %v1583 = vmul.f32 %v1581, 1.442695
      %v1584 = vpow.pop %v1583
      %v1585 = vmul.f32 %v1582, 1.442695
      %v1586 = vpow.pop %v1585
      %v1587 = vadd.f32 %v1584, 1.0
      %v1588 = vadd.f32 %v1586, 1.0
      %v1589 = vrcp.pop %v1587
      %v1590 = vmul.f32 1.0, %v1589
      %v1591 = vrcp.pop %v1588
      %v1592 = vmul.f32 1.0, %v1591
      %v1593 = vmul.f32 %v1576, %v1448
      %v1594 = vmul.f32 %v1578, %v1449
      %v1595 = vmul.f32 %v1564, %v1579
      %v1596 = vmul.f32 %v1566, %v1580
      %v1597 = vadd.f32 %v1593, %v1595
      %v1598 = vadd.f32 %v1594, %v1596
      %v1599 = vtanh.pop %v1597
      %v1600 = vtanh.pop %v1598
      %v1601 = vmul.f32 %v1590, %v1599
      %v1602 = vmul.f32 %v1592, %v1600
      %s1603 = sadd.s32 %s125, 4
      %v1604 = vstv %s1603
      %vm1605 = vcmp.lt.s32.totalorder %v1604, %v608
      %vm1606 = vcmp.lt.s32.totalorder %v1604, %v611
      %v1607 = vpack.c.bf16 %v1602, %v1601
      %vm1608 = vmpackc.low %vm1605, %vm1605
      %vm1609 = vmpackc.low %vm1606, %vm1606
      %v1610 = vsel %vm1608, 65537, 0
      %v1611 = vsel %vm1609, 65537, 0
      %v1612 = vunpack.c.l.b16 %v1610
      %v1613 = vunpack.c.l.b16 %v1611
      %v1614 = vpack.c.b16 %v1613, %v1612
      %vm1615 = vcmp.ne.s16.totalorder %v1614, 0
      %v1616 = vsel %vm1615, %v1607, %v1447
      %v1617 = vsel %vm1605, %v1597, %v1448
      %v1618 = vsel %vm1606, %v1598, %v1449
      %s1619 = smul.u32 10, 4
      %s1620 = smul.addr %s1619, 8
      %s1621 = scalar_lea.vmem [#allocation4], %s1620
      %v1622 = vld [vmem:[%s1621] sm:$0xff]
      %v1623 = vld [vmem:[%s1621 + $0x8] sm:$0xff]
      %v1624 = vld [vmem:[%s1621 + $0x10] sm:$0xff]
      %v1625 = vld [vmem:[%s1621 + $0x18] sm:$0xff]
      %v1626 = vld [vmem:[%s1621 + $0x20] sm:$0xff]
      %v1627 = vld [vmem:[%s1621 + $0x28] sm:$0xff]
      %v1628 = vld [vmem:[%s1621 + $0x30] sm:$0xff]
      %v1629 = vld [vmem:[%s1621 + $0x38] sm:$0xff]
      %1630 = vmatprep.subr.bf16.mxu0 %v723
      %1631 = vmatpush1.bf16.msra.mxu0 %v722
      %1632 = vmatprep.subr.bf16.mxu0 %v727
      %1633 = vmatpush1.bf16.msra.mxu0 %v726
      %1634 = vmatprep.subr.bf16.mxu0 %v731
      %1635 = vmatpush1.bf16.msra.mxu0 %v730
      %1636 = vmatprep.subr.bf16.mxu0 %v735
      %1637 = vmatpush1.bf16.msra.mxu0 %v734
      %1638 = vmatprep.subr.bf16.mxu0 %v739
      %1639 = vmatpush1.bf16.msra.mxu0 %v738
      %1640 = vmatprep.subr.bf16.mxu0 %v743
      %1641 = vmatpush1.bf16.msra.mxu0 %v742
      %1642 = vmatprep.subr.bf16.mxu0 %v747
      %1643 = vmatpush1.bf16.msra.mxu0 %v746
      %1644 = vmatprep.subr.bf16.mxu0 %v751
      %1645 = vmatpush1.bf16.msra.mxu0 %v750
      %1646 = vmatprep.subr.bf16.mxu0 0
      %1647 = vmatpush1.bf16.msra.mxu0 0
      %1648 = vmatprep.subr.bf16.mxu0 0
      %1649 = vmatpush1.bf16.msra.mxu0 0
      %1650 = vmatprep.subr.bf16.mxu0 0
      %1651 = vmatpush1.bf16.msra.mxu0 0
      %1652 = vmatprep.subr.bf16.mxu0 0
      %1653 = vmatpush1.bf16.msra.mxu0 0
      %1654 = vmatprep.subr.bf16.mxu0 0
      %1655 = vmatpush1.bf16.msra.mxu0 0
      %1656 = vmatprep.subr.bf16.mxu0 0
      %1657 = vmatpush1.bf16.msra.mxu0 0
      %1658 = vmatprep.subr.bf16.mxu0 0
      %1659 = vmatpush1.bf16.msra.mxu0 0
      %1660 = vmatprep.subr.bf16.mxu0 0
      %1661 = vmatpush1.bf16.msra.mxu0 0
      %1662 = vmatprep.mubr.bf16.mxu0 0
      %1663 = vmatmul.mubr.bf16.gmra.mrb[0].mxu0 %v1616
      %v1664 = vpop.f32.mrb[0].mxu0
      %v1665 = vadd.f32 0.0, %v1664
      %v1666 = vpop.f32.mrb[0].mxu0
      %v1667 = vadd.f32 0.0, %v1666
      %v1668 = vpop.f32.mrb[0].mxu0
      %v1669 = vadd.f32 0.0, %v1668
      %v1670 = vpop.f32.mrb[0].mxu0
      %v1671 = vadd.f32 0.0, %v1670
      %1672 = vdwg.mxu0
      %1673 = vmatprep.subr.bf16.mxu0 %v725
      %1674 = vmatpush1.bf16.msra.mxu0 %v724
      %1675 = vmatprep.subr.bf16.mxu0 %v729
      %1676 = vmatpush1.bf16.msra.mxu0 %v728
      %1677 = vmatprep.subr.bf16.mxu0 %v733
      %1678 = vmatpush1.bf16.msra.mxu0 %v732
      %1679 = vmatprep.subr.bf16.mxu0 %v737
      %1680 = vmatpush1.bf16.msra.mxu0 %v736
      %1681 = vmatprep.subr.bf16.mxu0 %v741
      %1682 = vmatpush1.bf16.msra.mxu0 %v740
      %1683 = vmatprep.subr.bf16.mxu0 %v745
      %1684 = vmatpush1.bf16.msra.mxu0 %v744
      %1685 = vmatprep.subr.bf16.mxu0 %v749
      %1686 = vmatpush1.bf16.msra.mxu0 %v748
      %1687 = vmatprep.subr.bf16.mxu0 %v753
      %1688 = vmatpush1.bf16.msra.mxu0 %v752
      %1689 = vmatprep.subr.bf16.mxu0 0
      %1690 = vmatpush1.bf16.msra.mxu0 0
      %1691 = vmatprep.subr.bf16.mxu0 0
      %1692 = vmatpush1.bf16.msra.mxu0 0
      %1693 = vmatprep.subr.bf16.mxu0 0
      %1694 = vmatpush1.bf16.msra.mxu0 0
      %1695 = vmatprep.subr.bf16.mxu0 0
      %1696 = vmatpush1.bf16.msra.mxu0 0
      %1697 = vmatprep.subr.bf16.mxu0 0
      %1698 = vmatpush1.bf16.msra.mxu0 0
      %1699 = vmatprep.subr.bf16.mxu0 0
      %1700 = vmatpush1.bf16.msra.mxu0 0
      %1701 = vmatprep.subr.bf16.mxu0 0
      %1702 = vmatpush1.bf16.msra.mxu0 0
      %1703 = vmatprep.subr.bf16.mxu0 0
      %1704 = vmatpush1.bf16.msra.mxu0 0
      %1705 = vmatprep.mubr.bf16.mxu0 0
      %1706 = vmatmul.mubr.bf16.gmra.mrb[0].mxu0 %v1616
      %v1707 = vpop.f32.mrb[0].mxu0
      %v1708 = vadd.f32 0.0, %v1707
      %v1709 = vpop.f32.mrb[0].mxu0
      %v1710 = vadd.f32 0.0, %v1709
      %v1711 = vpop.f32.mrb[0].mxu0
      %v1712 = vadd.f32 0.0, %v1711
      %v1713 = vpop.f32.mrb[0].mxu0
      %v1714 = vadd.f32 0.0, %v1713
      %1715 = vdwg.mxu0
      %v1716 = vadd.f32 %v1622, %v1665
      %v1717 = vadd.f32 %v1623, %v1667
      %v1718 = vadd.f32 %v1624, %v1708
      %v1719 = vadd.f32 %v1625, %v1710
      %v1720 = vadd.f32 %v1626, %v1669
      %v1721 = vadd.f32 %v1627, %v1671
      %v1722 = vadd.f32 %v1628, %v1712
      %v1723 = vadd.f32 %v1629, %v1714
      %v1724 = vxor.u32 %v1716, 2147483648
      %v1725 = vxor.u32 %v1720, 2147483648
      %v1726 = vmul.f32 %v1724, 1.442695
      %v1727 = vpow.pop %v1726
      %v1728 = vmul.f32 %v1725, 1.442695
      %v1729 = vpow.pop %v1728
      %v1730 = vadd.f32 %v1727, 1.0
      %v1731 = vadd.f32 %v1729, 1.0
      %v1732 = vrcp.pop %v1730
      %v1733 = vmul.f32 1.0, %v1732
      %v1734 = vrcp.pop %v1731
      %v1735 = vmul.f32 1.0, %v1734
      %v1736 = vxor.u32 %v1717, 2147483648
      %v1737 = vxor.u32 %v1721, 2147483648
      %v1738 = vmul.f32 %v1736, 1.442695
      %v1739 = vpow.pop %v1738
      %v1740 = vmul.f32 %v1737, 1.442695
      %v1741 = vpow.pop %v1740
      %v1742 = vadd.f32 %v1739, 1.0
      %v1743 = vadd.f32 %v1741, 1.0
      %v1744 = vrcp.pop %v1742
      %v1745 = vmul.f32 1.0, %v1744
      %v1746 = vrcp.pop %v1743
      %v1747 = vmul.f32 1.0, %v1746
      %v1748 = vtanh.pop %v1718
      %v1749 = vtanh.pop %v1722
      %v1750 = vxor.u32 %v1719, 2147483648
      %v1751 = vxor.u32 %v1723, 2147483648
      %v1752 = vmul.f32 %v1750, 1.442695
      %v1753 = vpow.pop %v1752
      %v1754 = vmul.f32 %v1751, 1.442695
      %v1755 = vpow.pop %v1754
      %v1756 = vadd.f32 %v1753, 1.0
      %v1757 = vadd.f32 %v1755, 1.0
      %v1758 = vrcp.pop %v1756
      %v1759 = vmul.f32 1.0, %v1758
      %v1760 = vrcp.pop %v1757
      %v1761 = vmul.f32 1.0, %v1760
      %v1762 = vmul.f32 %v1745, %v1617
      %v1763 = vmul.f32 %v1747, %v1618
      %v1764 = vmul.f32 %v1733, %v1748
      %v1765 = vmul.f32 %v1735, %v1749
      %v1766 = vadd.f32 %v1762, %v1764
      %v1767 = vadd.f32 %v1763, %v1765
      %v1768 = vtanh.pop %v1766
      %v1769 = vtanh.pop %v1767
      %v1770 = vmul.f32 %v1759, %v1768
      %v1771 = vmul.f32 %v1761, %v1769
      %s1772 = sadd.s32 %s125, 5
      %v1773 = vstv %s1772
      %vm1774 = vcmp.lt.s32.totalorder %v1773, %v608
      %vm1775 = vcmp.lt.s32.totalorder %v1773, %v611
      %v1776 = vpack.c.bf16 %v1771, %v1770
      %vm1777 = vmpackc.low %vm1774, %vm1774
      %vm1778 = vmpackc.low %vm1775, %vm1775
      %v1779 = vsel %vm1777, 65537, 0
      %v1780 = vsel %vm1778, 65537, 0
      %v1781 = vunpack.c.l.b16 %v1779
      %v1782 = vunpack.c.l.b16 %v1780
      %v1783 = vpack.c.b16 %v1782, %v1781
      %vm1784 = vcmp.ne.s16.totalorder %v1783, 0
      %v1785 = vsel %vm1784, %v1776, %v1616
      %v1786 = vsel %vm1774, %v1766, %v1617
      %v1787 = vsel %vm1775, %v1767, %v1618
      %s1788 = smul.u32 12, 4
      %s1789 = smul.addr %s1788, 8
      %s1790 = scalar_lea.vmem [#allocation4], %s1789
      %v1791 = vld [vmem:[%s1790] sm:$0xff]
      %v1792 = vld [vmem:[%s1790 + $0x8] sm:$0xff]
      %v1793 = vld [vmem:[%s1790 + $0x10] sm:$0xff]
      %v1794 = vld [vmem:[%s1790 + $0x18] sm:$0xff]
      %v1795 = vld [vmem:[%s1790 + $0x20] sm:$0xff]
      %v1796 = vld [vmem:[%s1790 + $0x28] sm:$0xff]
      %v1797 = vld [vmem:[%s1790 + $0x30] sm:$0xff]
      %v1798 = vld [vmem:[%s1790 + $0x38] sm:$0xff]
      %1799 = vmatprep.subr.bf16.mxu0 %v723
      %1800 = vmatpush1.bf16.msra.mxu0 %v722
      %1801 = vmatprep.subr.bf16.mxu0 %v727
      %1802 = vmatpush1.bf16.msra.mxu0 %v726
      %1803 = vmatprep.subr.bf16.mxu0 %v731
      %1804 = vmatpush1.bf16.msra.mxu0 %v730
      %1805 = vmatprep.subr.bf16.mxu0 %v735
      %1806 = vmatpush1.bf16.msra.mxu0 %v734
      %1807 = vmatprep.subr.bf16.mxu0 %v739
      %1808 = vmatpush1.bf16.msra.mxu0 %v738
      %1809 = vmatprep.subr.bf16.mxu0 %v743
      %1810 = vmatpush1.bf16.msra.mxu0 %v742
      %1811 = vmatprep.subr.bf16.mxu0 %v747
      %1812 = vmatpush1.bf16.msra.mxu0 %v746
      %1813 = vmatprep.subr.bf16.mxu0 %v751
      %1814 = vmatpush1.bf16.msra.mxu0 %v750
      %1815 = vmatprep.subr.bf16.mxu0 0
      %1816 = vmatpush1.bf16.msra.mxu0 0
      %1817 = vmatprep.subr.bf16.mxu0 0
      %1818 = vmatpush1.bf16.msra.mxu0 0
      %1819 = vmatprep.subr.bf16.mxu0 0
      %1820 = vmatpush1.bf16.msra.mxu0 0
      %1821 = vmatprep.subr.bf16.mxu0 0
      %1822 = vmatpush1.bf16.msra.mxu0 0
      %1823 = vmatprep.subr.bf16.mxu0 0
      %1824 = vmatpush1.bf16.msra.mxu0 0
      %1825 = vmatprep.subr.bf16.mxu0 0
      %1826 = vmatpush1.bf16.msra.mxu0 0
      %1827 = vmatprep.subr.bf16.mxu0 0
      %1828 = vmatpush1.bf16.msra.mxu0 0
      %1829 = vmatprep.subr.bf16.mxu0 0
      %1830 = vmatpush1.bf16.msra.mxu0 0
      %1831 = vmatprep.mubr.bf16.mxu0 0
      %1832 = vmatmul.mubr.bf16.gmra.mrb[0].mxu0 %v1785
      %v1833 = vpop.f32.mrb[0].mxu0
      %v1834 = vadd.f32 0.0, %v1833
      %v1835 = vpop.f32.mrb[0].mxu0
      %v1836 = vadd.f32 0.0, %v1835
      %v1837 = vpop.f32.mrb[0].mxu0
      %v1838 = vadd.f32 0.0, %v1837
      %v1839 = vpop.f32.mrb[0].mxu0
      %v1840 = vadd.f32 0.0, %v1839
      %1841 = vdwg.mxu0
      %1842 = vmatprep.subr.bf16.mxu0 %v725
      %1843 = vmatpush1.bf16.msra.mxu0 %v724
      %1844 = vmatprep.subr.bf16.mxu0 %v729
      %1845 = vmatpush1.bf16.msra.mxu0 %v728
      %1846 = vmatprep.subr.bf16.mxu0 %v733
      %1847 = vmatpush1.bf16.msra.mxu0 %v732
      %1848 = vmatprep.subr.bf16.mxu0 %v737
      %1849 = vmatpush1.bf16.msra.mxu0 %v736
      %1850 = vmatprep.subr.bf16.mxu0 %v741
      %1851 = vmatpush1.bf16.msra.mxu0 %v740
      %1852 = vmatprep.subr.bf16.mxu0 %v745
      %1853 = vmatpush1.bf16.msra.mxu0 %v744
      %1854 = vmatprep.subr.bf16.mxu0 %v749
      %1855 = vmatpush1.bf16.msra.mxu0 %v748
      %1856 = vmatprep.subr.bf16.mxu0 %v753
      %1857 = vmatpush1.bf16.msra.mxu0 %v752
      %1858 = vmatprep.subr.bf16.mxu0 0
      %1859 = vmatpush1.bf16.msra.mxu0 0
      %1860 = vmatprep.subr.bf16.mxu0 0
      %1861 = vmatpush1.bf16.msra.mxu0 0
      %1862 = vmatprep.subr.bf16.mxu0 0
      %1863 = vmatpush1.bf16.msra.mxu0 0
      %1864 = vmatprep.subr.bf16.mxu0 0
      %1865 = vmatpush1.bf16.msra.mxu0 0
      %1866 = vmatprep.subr.bf16.mxu0 0
      %1867 = vmatpush1.bf16.msra.mxu0 0
      %1868 = vmatprep.subr.bf16.mxu0 0
      %1869 = vmatpush1.bf16.msra.mxu0 0
      %1870 = vmatprep.subr.bf16.mxu0 0
      %1871 = vmatpush1.bf16.msra.mxu0 0
      %1872 = vmatprep.subr.bf16.mxu0 0
      %1873 = vmatpush1.bf16.msra.mxu0 0
      %1874 = vmatprep.mubr.bf16.mxu0 0
      %1875 = vmatmul.mubr.bf16.gmra.mrb[0].mxu0 %v1785
      %v1876 = vpop.f32.mrb[0].mxu0
      %v1877 = vadd.f32 0.0, %v1876
      %v1878 = vpop.f32.mrb[0].mxu0
      %v1879 = vadd.f32 0.0, %v1878
      %v1880 = vpop.f32.mrb[0].mxu0
      %v1881 = vadd.f32 0.0, %v1880
      %v1882 = vpop.f32.mrb[0].mxu0
      %v1883 = vadd.f32 0.0, %v1882
      %1884 = vdwg.mxu0
      %v1885 = vadd.f32 %v1791, %v1834
      %v1886 = vadd.f32 %v1792, %v1836
      %v1887 = vadd.f32 %v1793, %v1877
      %v1888 = vadd.f32 %v1794, %v1879
      %v1889 = vadd.f32 %v1795, %v1838
      %v1890 = vadd.f32 %v1796, %v1840
      %v1891 = vadd.f32 %v1797, %v1881
      %v1892 = vadd.f32 %v1798, %v1883
      %v1893 = vxor.u32 %v1885, 2147483648
      %v1894 = vxor.u32 %v1889, 2147483648
      %v1895 = vmul.f32 %v1893, 1.442695
      %v1896 = vpow.pop %v1895
      %v1897 = vmul.f32 %v1894, 1.442695
      %v1898 = vpow.pop %v1897
      %v1899 = vadd.f32 %v1896, 1.0
      %v1900 = vadd.f32 %v1898, 1.0
      %v1901 = vrcp.pop %v1899
      %v1902 = vmul.f32 1.0, %v1901
      %v1903 = vrcp.pop %v1900
      %v1904 = vmul.f32 1.0, %v1903
      %v1905 = vxor.u32 %v1886, 2147483648
      %v1906 = vxor.u32 %v1890, 2147483648
      %v1907 = vmul.f32 %v1905, 1.442695
      %v1908 = vpow.pop %v1907
      %v1909 = vmul.f32 %v1906, 1.442695
      %v1910 = vpow.pop %v1909
      %v1911 = vadd.f32 %v1908, 1.0
      %v1912 = vadd.f32 %v1910, 1.0
      %v1913 = vrcp.pop %v1911
      %v1914 = vmul.f32 1.0, %v1913
      %v1915 = vrcp.pop %v1912
      %v1916 = vmul.f32 1.0, %v1915
      %v1917 = vtanh.pop %v1887
      %v1918 = vtanh.pop %v1891
      %v1919 = vxor.u32 %v1888, 2147483648
      %v1920 = vxor.u32 %v1892, 2147483648
      %v1921 = vmul.f32 %v1919, 1.442695
      %v1922 = vpow.pop %v1921
      %v1923 = vmul.f32 %v1920, 1.442695
      %v1924 = vpow.pop %v1923
      %v1925 = vadd.f32 %v1922, 1.0
      %v1926 = vadd.f32 %v1924, 1.0
      %v1927 = vrcp.pop %v1925
      %v1928 = vmul.f32 1.0, %v1927
      %v1929 = vrcp.pop %v1926
      %v1930 = vmul.f32 1.0, %v1929
      %v1931 = vmul.f32 %v1914, %v1786
      %v1932 = vmul.f32 %v1916, %v1787
      %v1933 = vmul.f32 %v1902, %v1917
      %v1934 = vmul.f32 %v1904, %v1918
      %v1935 = vadd.f32 %v1931, %v1933
      %v1936 = vadd.f32 %v1932, %v1934
      %v1937 = vtanh.pop %v1935
      %v1938 = vtanh.pop %v1936
      %v1939 = vmul.f32 %v1928, %v1937
      %v1940 = vmul.f32 %v1930, %v1938
      %s1941 = sadd.s32 %s125, 6
      %v1942 = vstv %s1941
      %vm1943 = vcmp.lt.s32.totalorder %v1942, %v608
      %vm1944 = vcmp.lt.s32.totalorder %v1942, %v611
      %v1945 = vpack.c.bf16 %v1940, %v1939
      %vm1946 = vmpackc.low %vm1943, %vm1943
      %vm1947 = vmpackc.low %vm1944, %vm1944
      %v1948 = vsel %vm1946, 65537, 0
      %v1949 = vsel %vm1947, 65537, 0
      %v1950 = vunpack.c.l.b16 %v1948
      %v1951 = vunpack.c.l.b16 %v1949
      %v1952 = vpack.c.b16 %v1951, %v1950
      %vm1953 = vcmp.ne.s16.totalorder %v1952, 0
      %v1954 = vsel %vm1953, %v1945, %v1785
      %v1955 = vsel %vm1943, %v1935, %v1786
      %v1956 = vsel %vm1944, %v1936, %v1787
      %s1957 = smul.u32 14, 4
      %s1958 = smul.addr %s1957, 8
      %s1959 = scalar_lea.vmem [#allocation4], %s1958
      %v1960 = vld [vmem:[%s1959] sm:$0xff]
      %v1961 = vld [vmem:[%s1959 + $0x8] sm:$0xff]
      %v1962 = vld [vmem:[%s1959 + $0x10] sm:$0xff]
      %v1963 = vld [vmem:[%s1959 + $0x18] sm:$0xff]
      %v1964 = vld [vmem:[%s1959 + $0x20] sm:$0xff]
      %v1965 = vld [vmem:[%s1959 + $0x28] sm:$0xff]
      %v1966 = vld [vmem:[%s1959 + $0x30] sm:$0xff]
      %v1967 = vld [vmem:[%s1959 + $0x38] sm:$0xff]
      %1968 = vmatprep.subr.bf16.mxu0 %v723
      %1969 = vmatpush1.bf16.msra.mxu0 %v722
      %1970 = vmatprep.subr.bf16.mxu0 %v727
      %1971 = vmatpush1.bf16.msra.mxu0 %v726
      %1972 = vmatprep.subr.bf16.mxu0 %v731
      %1973 = vmatpush1.bf16.msra.mxu0 %v730
      %1974 = vmatprep.subr.bf16.mxu0 %v735
      %1975 = vmatpush1.bf16.msra.mxu0 %v734
      %1976 = vmatprep.subr.bf16.mxu0 %v739
      %1977 = vmatpush1.bf16.msra.mxu0 %v738
      %1978 = vmatprep.subr.bf16.mxu0 %v743
      %1979 = vmatpush1.bf16.msra.mxu0 %v742
      %1980 = vmatprep.subr.bf16.mxu0 %v747
      %1981 = vmatpush1.bf16.msra.mxu0 %v746
      %1982 = vmatprep.subr.bf16.mxu0 %v751
      %1983 = vmatpush1.bf16.msra.mxu0 %v750
      %1984 = vmatprep.subr.bf16.mxu0 0
      %1985 = vmatpush1.bf16.msra.mxu0 0
      %1986 = vmatprep.subr.bf16.mxu0 0
      %1987 = vmatpush1.bf16.msra.mxu0 0
      %1988 = vmatprep.subr.bf16.mxu0 0
      %1989 = vmatpush1.bf16.msra.mxu0 0
      %1990 = vmatprep.subr.bf16.mxu0 0
      %1991 = vmatpush1.bf16.msra.mxu0 0
      %1992 = vmatprep.subr.bf16.mxu0 0
      %1993 = vmatpush1.bf16.msra.mxu0 0
      %1994 = vmatprep.subr.bf16.mxu0 0
      %1995 = vmatpush1.bf16.msra.mxu0 0
      %1996 = vmatprep.subr.bf16.mxu0 0
      %1997 = vmatpush1.bf16.msra.mxu0 0
      %1998 = vmatprep.subr.bf16.mxu0 0
      %1999 = vmatpush1.bf16.msra.mxu0 0
      %2000 = vmatprep.mubr.bf16.mxu0 0
      %2001 = vmatmul.mubr.bf16.gmra.mrb[0].mxu0 %v1954
      %v2002 = vpop.f32.mrb[0].mxu0
      %v2003 = vadd.f32 0.0, %v2002
      %v2004 = vpop.f32.mrb[0].mxu0
      %v2005 = vadd.f32 0.0, %v2004
      %v2006 = vpop.f32.mrb[0].mxu0
      %v2007 = vadd.f32 0.0, %v2006
      %v2008 = vpop.f32.mrb[0].mxu0
      %v2009 = vadd.f32 0.0, %v2008
      %2010 = vdwg.mxu0
      %2011 = vmatprep.subr.bf16.mxu0 %v725
      %2012 = vmatpush1.bf16.msra.mxu0 %v724
      %2013 = vmatprep.subr.bf16.mxu0 %v729
      %2014 = vmatpush1.bf16.msra.mxu0 %v728
      %2015 = vmatprep.subr.bf16.mxu0 %v733
      %2016 = vmatpush1.bf16.msra.mxu0 %v732
      %2017 = vmatprep.subr.bf16.mxu0 %v737
      %2018 = vmatpush1.bf16.msra.mxu0 %v736
      %2019 = vmatprep.subr.bf16.mxu0 %v741
      %2020 = vmatpush1.bf16.msra.mxu0 %v740
      %2021 = vmatprep.subr.bf16.mxu0 %v745
      %2022 = vmatpush1.bf16.msra.mxu0 %v744
      %2023 = vmatprep.subr.bf16.mxu0 %v749
      %2024 = vmatpush1.bf16.msra.mxu0 %v748
      %2025 = vmatprep.subr.bf16.mxu0 %v753
      %2026 = vmatpush1.bf16.msra.mxu0 %v752
      %2027 = vmatprep.subr.bf16.mxu0 0
      %2028 = vmatpush1.bf16.msra.mxu0 0
      %2029 = vmatprep.subr.bf16.mxu0 0
      %2030 = vmatpush1.bf16.msra.mxu0 0
      %2031 = vmatprep.subr.bf16.mxu0 0
      %2032 = vmatpush1.bf16.msra.mxu0 0
      %2033 = vmatprep.subr.bf16.mxu0 0
      %2034 = vmatpush1.bf16.msra.mxu0 0
      %2035 = vmatprep.subr.bf16.mxu0 0
      %2036 = vmatpush1.bf16.msra.mxu0 0
      %2037 = vmatprep.subr.bf16.mxu0 0
      %2038 = vmatpush1.bf16.msra.mxu0 0
      %2039 = vmatprep.subr.bf16.mxu0 0
      %2040 = vmatpush1.bf16.msra.mxu0 0
      %2041 = vmatprep.subr.bf16.mxu0 0
      %2042 = vmatpush1.bf16.msra.mxu0 0
      %2043 = vmatprep.mubr.bf16.mxu0 0
      %2044 = vmatmul.mubr.bf16.gmra.mrb[0].mxu0 %v1954
      %v2045 = vpop.f32.mrb[0].mxu0
      %v2046 = vadd.f32 0.0, %v2045
      %v2047 = vpop.f32.mrb[0].mxu0
      %v2048 = vadd.f32 0.0, %v2047
      %v2049 = vpop.f32.mrb[0].mxu0
      %v2050 = vadd.f32 0.0, %v2049
      %v2051 = vpop.f32.mrb[0].mxu0
      %v2052 = vadd.f32 0.0, %v2051
      %2053 = vdwg.mxu0
      %v2054 = vadd.f32 %v1960, %v2003
      %v2055 = vadd.f32 %v1961, %v2005
      %v2056 = vadd.f32 %v1962, %v2046
      %v2057 = vadd.f32 %v1963, %v2048
      %v2058 = vadd.f32 %v1964, %v2007
      %v2059 = vadd.f32 %v1965, %v2009
      %v2060 = vadd.f32 %v1966, %v2050
      %v2061 = vadd.f32 %v1967, %v2052
      %v2062 = vxor.u32 %v2054, 2147483648
      %v2063 = vxor.u32 %v2058, 2147483648
      %v2064 = vmul.f32 %v2062, 1.442695
      %v2065 = vpow.pop %v2064
      %v2066 = vmul.f32 %v2063, 1.442695
      %v2067 = vpow.pop %v2066
      %v2068 = vadd.f32 %v2065, 1.0
      %v2069 = vadd.f32 %v2067, 1.0
      %v2070 = vrcp.pop %v2068
      %v2071 = vmul.f32 1.0, %v2070
      %v2072 = vrcp.pop %v2069
      %v2073 = vmul.f32 1.0, %v2072
      %v2074 = vxor.u32 %v2055, 2147483648
      %v2075 = vxor.u32 %v2059, 2147483648
      %v2076 = vmul.f32 %v2074, 1.442695
      %v2077 = vpow.pop %v2076
      %v2078 = vmul.f32 %v2075, 1.442695
      %v2079 = vpow.pop %v2078
      %v2080 = vadd.f32 %v2077, 1.0
      %v2081 = vadd.f32 %v2079, 1.0
      %v2082 = vrcp.pop %v2080
      %v2083 = vmul.f32 1.0, %v2082
      %v2084 = vrcp.pop %v2081
      %v2085 = vmul.f32 1.0, %v2084
      %v2086 = vtanh.pop %v2056
      %v2087 = vtanh.pop %v2060
      %v2088 = vxor.u32 %v2057, 2147483648
      %v2089 = vxor.u32 %v2061, 2147483648
      %v2090 = vmul.f32 %v2088, 1.442695
      %v2091 = vpow.pop %v2090
      %v2092 = vmul.f32 %v2089, 1.442695
      %v2093 = vpow.pop %v2092
      %v2094 = vadd.f32 %v2091, 1.0
      %v2095 = vadd.f32 %v2093, 1.0
      %v2096 = vrcp.pop %v2094
      %v2097 = vmul.f32 1.0, %v2096
      %v2098 = vrcp.pop %v2095
      %v2099 = vmul.f32 1.0, %v2098
      %v2100 = vmul.f32 %v2083, %v1955
      %v2101 = vmul.f32 %v2085, %v1956
      %v2102 = vmul.f32 %v2071, %v2086
      %v2103 = vmul.f32 %v2073, %v2087
      %v2104 = vadd.f32 %v2100, %v2102
      %v2105 = vadd.f32 %v2101, %v2103
      %v2106 = vtanh.pop %v2104
      %v2107 = vtanh.pop %v2105
      %v2108 = vmul.f32 %v2097, %v2106
      %v2109 = vmul.f32 %v2099, %v2107
      %s2110 = sadd.s32 %s125, 7
      %v2111 = vstv %s2110
      %vm2112 = vcmp.lt.s32.totalorder %v2111, %v608
      %vm2113 = vcmp.lt.s32.totalorder %v2111, %v611
      %v2114 = vpack.c.bf16 %v2109, %v2108
      %vm2115 = vmpackc.low %vm2112, %vm2112
      %vm2116 = vmpackc.low %vm2113, %vm2113
      %v2117 = vsel %vm2115, 65537, 0
      %v2118 = vsel %vm2116, 65537, 0
      %v2119 = vunpack.c.l.b16 %v2117
      %v2120 = vunpack.c.l.b16 %v2118
      %v2121 = vpack.c.b16 %v2120, %v2119
      %vm2122 = vcmp.ne.s16.totalorder %v2121, 0
      %v2123 = vsel %vm2122, %v2114, %v1954
      %v2124 = vsel %vm2112, %v2104, %v1955
      %v2125 = vsel %vm2113, %v2105, %v1956
      %2126 = vst [vmem:[#allocation2] sm:$0xff] %v2123
      %2127 = vst [vmem:[#allocation3] sm:$0xff] %v2124
      %2128 = vst [vmem:[#allocation3 + $0x8] sm:$0xff] %v2125
    $region53: #{tpu_custom_call.1} parent=1 // pred_fallthru
      _
    // Predicated region
    $region54: #{tpu_custom_call.1} parent=1 // pred_check
      %p2129 = pneg %p118
    $region55: #{tpu_custom_call.1} parent=1 // pred_check_branch
      %2131 = sbr.rel (%p2129) target = $region57
    $region56: #{tpu_custom_call.1} parent=1 // pred_region
      %v2132 = vld [vmem:[#allocation2] sm:$0xff]
      %v2133 = vld [vmem:[#allocation13] sm:$0xf]
      %v2134 = vld [vmem:[#allocation13 + $0x4] sm:$0xf]
      %v2135 = vld [vmem:[#allocation13 + $0x8] sm:$0xf]
      %v2136 = vld [vmem:[#allocation13 + $0xc] sm:$0xf]
      %v2137 = vld [vmem:[#allocation13 + $0x10] sm:$0xf]
      %v2138 = vld [vmem:[#allocation13 + $0x14] sm:$0xf]
      %v2139 = vld [vmem:[#allocation13 + $0x18] sm:$0xf]
      %v2140 = vld [vmem:[#allocation13 + $0x1c] sm:$0xf]
      %v2141 = vld [vmem:[#allocation13 + $0x20] sm:$0xf]
      %v2142 = vld [vmem:[#allocation13 + $0x24] sm:$0xf]
      %v2143 = vld [vmem:[#allocation13 + $0x28] sm:$0xf]
      %v2144 = vld [vmem:[#allocation13 + $0x2c] sm:$0xf]
      %v2145 = vld [vmem:[#allocation13 + $0x30] sm:$0xf]
      %v2146 = vld [vmem:[#allocation13 + $0x34] sm:$0xf]
      %v2147 = vld [vmem:[#allocation13 + $0x38] sm:$0xf]
      %v2148 = vld [vmem:[#allocation13 + $0x3c] sm:$0xf]
      %v2149 = vld [vmem:[%s7] sm:$0x1]
      %v2151 = vlaneseq
      %v2152 = vshrl.u32 %v2151, 7
      %v2153 = vsub.s32 0, %v2152
      %v2154 = vrot.slane %v2149, %v2153
      %v2172 = vunpack.c.l.b16 %v2133
      %v2173 = vunpack.c.l.b16 %v2134
      %v2174 = vunpack.c.l.b16 %v2135
      %v2175 = vunpack.c.l.b16 %v2136
      %v2176 = vunpack.c.l.b16 %v2137
      %v2177 = vunpack.c.l.b16 %v2138
      %v2178 = vunpack.c.l.b16 %v2139
      %v2179 = vunpack.c.l.b16 %v2140
      %v2180 = vunpack.c.l.b16 %v2141
      %v2181 = vunpack.c.l.b16 %v2142
      %v2182 = vunpack.c.l.b16 %v2143
      %v2183 = vunpack.c.l.b16 %v2144
      %v2184 = vunpack.c.l.b16 %v2145
      %v2185 = vunpack.c.l.b16 %v2146
      %v2186 = vunpack.c.l.b16 %v2147
      %v2187 = vunpack.c.l.b16 %v2148
      %v2188 = vpack.c.b16 %v2173, %v2172
      %v2189 = vpack.c.b16 %v2175, %v2174
      %v2190 = vpack.c.b16 %v2177, %v2176
      %v2191 = vpack.c.b16 %v2179, %v2178
      %v2192 = vpack.c.b16 %v2181, %v2180
      %v2193 = vpack.c.b16 %v2183, %v2182
      %v2194 = vpack.c.b16 %v2185, %v2184
      %v2195 = vpack.c.b16 %v2187, %v2186
      %2204 = vmatprep.subr.bf16.mxu0 0
      %2205 = vmatpush1.bf16.msra.mxu0 %v2188
      %2206 = vmatprep.subr.bf16.mxu0 0
      %2207 = vmatpush1.bf16.msra.mxu0 %v2189
      %2208 = vmatprep.subr.bf16.mxu0 0
      %2209 = vmatpush1.bf16.msra.mxu0 %v2190
      %2210 = vmatprep.subr.bf16.mxu0 0
      %2211 = vmatpush1.bf16.msra.mxu0 %v2191
      %2212 = vmatprep.subr.bf16.mxu0 0
      %2213 = vmatpush1.bf16.msra.mxu0 %v2192
      %2214 = vmatprep.subr.bf16.mxu0 0
      %2215 = vmatpush1.bf16.msra.mxu0 %v2193
      %2216 = vmatprep.subr.bf16.mxu0 0
      %2217 = vmatpush1.bf16.msra.mxu0 %v2194
      %2218 = vmatprep.subr.bf16.mxu0 0
      %2219 = vmatpush1.bf16.msra.mxu0 %v2195
      %2220 = vmatprep.subr.bf16.mxu0 0
      %2221 = vmatpush1.bf16.msra.mxu0 0
      %2222 = vmatprep.subr.bf16.mxu0 0
      %2223 = vmatpush1.bf16.msra.mxu0 0
      %2224 = vmatprep.subr.bf16.mxu0 0
      %2225 = vmatpush1.bf16.msra.mxu0 0
      %2226 = vmatprep.subr.bf16.mxu0 0
      %2227 = vmatpush1.bf16.msra.mxu0 0
      %2228 = vmatprep.subr.bf16.mxu0 0
      %2229 = vmatpush1.bf16.msra.mxu0 0
      %2230 = vmatprep.subr.bf16.mxu0 0
      %2231 = vmatpush1.bf16.msra.mxu0 0
      %2232 = vmatprep.subr.bf16.mxu0 0
      %2233 = vmatpush1.bf16.msra.mxu0 0
      %2234 = vmatprep.subr.bf16.mxu0 0
      %2235 = vmatpush1.bf16.msra.mxu0 0
      %2236 = vmatprep.mubr.bf16.mxu0 0
      %2237 = vmatmul.mubr.bf16.gmra.mrb[0].mxu0 %v2132
      %v2238 = vpop.f32.mrb[0].mxu0
      %v2239 = vadd.f32 %v2154, %v2238
      %v2240 = vpop.f32.mrb[0].mxu0
      %v2241 = vpop.f32.mrb[0].mxu0
      %v2242 = vadd.f32 %v2154, %v2241
      %v2243 = vpop.f32.mrb[0].mxu0
      %2244 = vdwg.mxu0
      %v2245 = vmax.f32 %v2239, 0.0
      %v2246 = vmax.f32 %v2242, 0.0
      %v2247 = vpack.c.bf16 %v2246, %v2245
      %v2249 = vunpack.c.l.b16 %v2247
      %v2250 = vunpack.c.h.b16 %v2247
      %v2251 = vpack.c.b16 %v2249, %v2249
      %v2252 = vpack.c.b16 %v2250, %v2250
      %2255 = vst [vmem:[#allocation15] sm:$0xf] %v2251
      %2256 = vst [vmem:[#allocation15 + $0x4] sm:$0xf] %v2252
    $region57: #{tpu_custom_call.1} parent=1 // pred_fallthru
      _
    // Predicated region
    $region58: #{tpu_custom_call.1} parent=1 // pred_check
      _
    $region59: #{tpu_custom_call.1} parent=1 // pred_check_branch
      %2258 = sbr.rel (0) target = $region61
    $region60: #{tpu_custom_call.1} parent=1 // pred_region
      %s2260 = ssub.s32 128, 128
      %2261 = vsyncadd [#allocation9], %s2260
      %s2262 = sshll.u32 [#allocation15], 4
      %s2263 = int_to_ptr.vmem [resolvable:$true] %s2262
      %2268 = dma.vmem_to_hbm [thread:$0]  %s2263, 128, %s8, [#allocation9], 64, 64, 4
    $region61: #{tpu_custom_call.1} parent=1 // pred_fallthru
      _
    // Predicated region
    $region62: #{tpu_custom_call.1} parent=1 // pred_check
      _
    $region63: #{tpu_custom_call.1} parent=1 // pred_check_branch
      %2270 = sbr.rel (0) target = $region65
    $region64: #{tpu_custom_call.1} parent=1 // pred_region
      %2271 = dma.done [#allocation9], 128
    $region65: #{tpu_custom_call.1} parent=1 // pred_fallthru
      _
    %2272 = vsyncpa [#allocation8], 1
    %2273 = vsyncpa [#allocation11], 1
    %2274 = vsyncpa [#allocation14], 1
    %2275 = vsyncpa [#allocation9], 1

</llo_original>
